<compile_context>
chip_gen: v7x
topology: tpu7x:2x2x1
jax: 0.10.0
libtpu: 0.0.40
codegen_flags: <defaults>
</compile_context>

<pallas_src>
import functools

import jax
import jax.numpy as jnp
from jax import lax
from jax.experimental import pallas as pl
from jax.experimental.pallas import tpu as pltpu


def _round_up(x, m):
    return ((x + m - 1) // m) * m


_S = 128  # lane slab per gate: [0,H) fwd | [H,2H) bwd | rest zero-pad


# -----------------------------------------------------------------------------
# Pallas kernel
# -----------------------------------------------------------------------------
def _make_kernel(T, Bp, H, Cp):
    S = _S
    G3 = 3 * S  # r | z | n slabs, both directions packed inside each slab

    def kernel(x_ref,      # (T*Bp, E)  bf16, time-major embedded tokens
               wih_ref,    # (E, G3)    bf16, merged-direction input weights
               bi_ref,     # (1, G3)    f32, folded input biases (r/z + b_hh)
               whh_ref,    # (S, G3)    bf16, merged-direction hidden weights
               bhn_ref,    # (1, S)     f32, n-gate hidden bias (both dirs)
               wfc_ref,    # (S, Cp)    bf16, FC over [h_f | h_b | 0] lanes
               bfc_ref,    # (1, Cp)    f32
               out_ref,    # (Bp, Cp)   f32
               gi_ref):    # scratch (T*Bp, G3) f32
        # ---- 1. Hoisted input projection for both directions / all gates:
        #         one wide bf16 matmul with f32 accumulation, fully off the
        #         serial dependency chain.
        gi_ref[...] = (
            jnp.dot(x_ref[...], wih_ref[...], preferred_element_type=jnp.float32)
            + bi_ref[...]
        )

        # Loop-invariant loads / constants hoisted out of the recurrence.
        whh = whh_ref[...]                      # (S, G3) bf16
        bhn = bhn_ref[...]                      # (1, S)  f32
        lane = lax.broadcasted_iota(jnp.int32, (Bp, G3), 1)
        take_fwd = (lane % S) < H               # fwd lanes read time t,
                                                # bwd lanes read time T-1-t

        h = jnp.zeros((Bp, S), jnp.float32)     # [h_f | h_b | 0-pad] lanes

        # ---- 2. Fused fwd+bwd recurrence: ONE (Bp,128)x(128,384) MXU matmul
        #         per step; gates of both directions share vregs.  T is small
        #         and static -> fully unrolled Python loop (static, 8-aligned
        #         slice starts).
        for t in range(T):
            gi_f = gi_ref[pl.ds(t * Bp, Bp), :]
            gi_b = gi_ref[pl.ds((T - 1 - t) * Bp, Bp), :]
            gi_t = jnp.where(take_fwd, gi_f, gi_b)          # (Bp, G3)
            gh = jnp.dot(h.astype(jnp.bfloat16), whh,
                         preferred_element_type=jnp.float32)  # (Bp, G3)
            r = jax.nn.sigmoid(gi_t[:, 0:S] + gh[:, 0:S])
            z = jax.nn.sigmoid(gi_t[:, S:2 * S] + gh[:, S:2 * S])
            n = jnp.tanh(gi_t[:, 2 * S:] + r * (gh[:, 2 * S:] + bhn))
            h = (1.0 - z) * n + z * h
            # Pad lanes stay exactly 0: wih/whh/bias pad cols & whh pad rows
            # are 0 => r=z=0.5, n=0, h_pad -> 0.5*h_pad = 0.

        # ---- 3. Final Linear: single matmul over the merged hidden lanes.
        out_ref[...] = (
            jnp.dot(h.astype(jnp.bfloat16), wfc_ref[...],
                    preferred_element_type=jnp.float32)
            + bfc_ref[...]
        )

    return kernel


# -----------------------------------------------------------------------------
# One-time weight re-layout (outside the jitted forward).
# -----------------------------------------------------------------------------
def prepare_params(params, *, hidden_dim, num_classes):
    H, C = hidden_dim, num_classes
    S = _S
    assert 2 * H <= S, "merged-direction layout needs 2*hidden_dim <= 128"
    G3 = 3 * S
    Cp = _round_up(C, 128)
    E = params["w_ih_f"].shape[1]

    # --- input weights: (3H, E) per dir -> (E, G3), fwd lanes [0,H), bwd [H,2H)
    wih = jnp.zeros((E, G3), jnp.float32)
    wih_f_t = params["w_ih_f"].T.astype(jnp.float32)   # (E, 3H)
    wih_b_t = params["w_ih_b"].T.astype(jnp.float32)
    for g in range(3):
        wih = wih.at[:, g * S:g * S + H].set(wih_f_t[:, g * H:(g + 1) * H])
        wih = wih.at[:, g * S + H:g * S + 2 * H].set(wih_b_t[:, g * H:(g + 1) * H])

    # --- hidden weights: rows 0:H = h_f -> fwd cols, rows H:2H = h_b -> bwd cols
    whh = jnp.zeros((S, G3), jnp.float32)
    whh_f_t = params["w_hh_f"].T.astype(jnp.float32)   # (H, 3H)
    whh_b_t = params["w_hh_b"].T.astype(jnp.float32)
    for g in range(3):
        whh = whh.at[0:H, g * S:g * S + H].set(whh_f_t[:, g * H:(g + 1) * H])
        whh = whh.at[H:2 * H, g * S + H:g * S + 2 * H].set(
            whh_b_t[:, g * H:(g + 1) * H])

    # --- folded input bias: r/z gates get b_ih + b_hh, n gate gets b_ih only.
    def fold(b_ih, b_hh):
        return jnp.concatenate(
            [b_ih[:2 * H] + b_hh[:2 * H], b_ih[2 * H:]]).astype(jnp.float32)

    bi = jnp.zeros((G3,), jnp.float32)
    bf_f, bf_b = fold(params["b_ih_f"], params["b_hh_f"]), \
                 fold(params["b_ih_b"], params["b_hh_b"])
    for g in range(3):
        bi = bi.at[g * S:g * S + H].set(bf_f[g * H:(g + 1) * H])
        bi = bi.at[g * S + H:g * S + 2 * H].set(bf_b[g * H:(g + 1) * H])

    # --- n-gate hidden bias (stays inside the recurrence, under r*(...)).
    bhn = jnp.zeros((S,), jnp.float32)
    bhn = bhn.at[0:H].set(params["b_hh_f"][2 * H:].astype(jnp.float32))
    bhn = bhn.at[H:2 * H].set(params["b_hh_b"][2 * H:].astype(jnp.float32))

    # --- FC over the merged hidden lanes [h_f | h_b | 0-pad].
    wfc = jnp.zeros((S, Cp), jnp.float32)
    wfc = wfc.at[0:2 * H, :C].set(params["w_fc"].T.astype(jnp.float32))
    bfc = jnp.zeros((Cp,), jnp.float32).at[:C].set(
        params["b_fc"].astype(jnp.float32))

    return {
        "embedding": params["embedding"].astype(jnp.bfloat16),
        "w_ih_all": wih.astype(jnp.bfloat16),
        "b_i_all": bi[None, :],
        "w_hh_cat": whh.astype(jnp.bfloat16),
        "b_hn_cat": bhn[None, :],
        "w_fc_cat": wfc.astype(jnp.bfloat16),
        "b_fc": bfc[None, :],
    }


# -----------------------------------------------------------------------------
# Jitted forward: gather (glue) + pallas_call.
# -----------------------------------------------------------------------------
@functools.partial(jax.jit, static_argnames=("hidden_dim", "num_classes"))
def sentiment_classifier_gru_forward(tokens, kparams, *, hidden_dim, num_classes):
    H, C = hidden_dim, num_classes
    S = _S
    G3 = 3 * S
    Cp = _round_up(C, 128)

    # Embedding lookup directly in time-major order (permute(1,0,2) folded into
    # the gather). embedding_dropout (p=0.5): identity in eval mode.
    x = kparams["embedding"][tokens.T]                 # (T, B, E) bf16
    T, B, E = x.shape
    Bp = _round_up(B, 8)                               # sublane-align the batch
    if Bp != B:
        x = jnp.pad(x, ((0, 0), (0, Bp - B), (0, 0)))
    x2 = x.reshape(T * Bp, E)                          # free row-major view

    flops = 2 * T * Bp * E * G3 + 2 * T * Bp * S * G3 + 2 * Bp * S * Cp
    transcendentals = T * Bp * 3 * S
    bytes_accessed = (x2.size * 2
                      + (E * G3 + S * G3 + S * Cp) * 2
                      + (G3 + S + Cp) * 4
                      + Bp * Cp * 4)

    vmem = pl.BlockSpec(memory_space=pltpu.MemorySpace.VMEM)
    out = pl.pallas_call(
        _make_kernel(T, Bp, H, Cp),
        out_shape=jax.ShapeDtypeStruct((Bp, Cp), jnp.float32),
        in_specs=[vmem] * 7,
        out_specs=vmem,
        scratch_shapes=[pltpu.VMEM((T * Bp, G3), jnp.float32)],
        cost_estimate=pl.CostEstimate(flops=flops,
                                      transcendentals=transcendentals,
                                      bytes_accessed=bytes_accessed),
    )(
        x2,
        kparams["w_ih_all"], kparams["b_i_all"],
        kparams["w_hh_cat"], kparams["b_hn_cat"],
        kparams["w_fc_cat"], kparams["b_fc"],
    )
    # rnn_dropout (p=0.5): identity in eval mode. Drop batch/lane padding.
    return out[:B, :C]


# -----------------------------------------------------------------------------
# Pure-JAX f32 reference (PyTorch GRU semantics) for the correctness check.
# -----------------------------------------------------------------------------
def reference_forward(tokens, params, *, hidden_dim, num_classes):
    H = hidden_dim
    emb = params["embedding"][tokens]                        # (B, T, E)
    x = jnp.transpose(emb, (1, 0, 2)).astype(jnp.float32)    # (T, B, E)
    B = x.shape[1]

    def cell(x_t, h, w_ih, w_hh, b_ih, b_hh):
        gi = x_t @ w_ih.T + b_ih
        gh = h @ w_hh.T + b_hh
        i_r, i_z, i_n = gi[:, :H], gi[:, H:2 * H], gi[:, 2 * H:]
        h_r, h_z, h_n = gh[:, :H], gh[:, H:2 * H], gh[:, 2 * H:]
        r = jax.nn.sigmoid(i_r + h_r)
        z = jax.nn.sigmoid(i_z + h_z)
        n = jnp.tanh(i_n + r * h_n)
        return (1.0 - z) * n + z * h

    def run_dir(xs, w_ih, w_hh, b_ih, b_hh):
        def step(h, x_t):
            return cell(x_t, h, w_ih, w_hh, b_ih, b_hh), None
        h_last, _ = lax.scan(step, jnp.zeros((B, H), jnp.float32), xs)
        return h_last

    h_f = run_dir(x, params["w_ih_f"], params["w_hh_f"],
                  params["b_ih_f"], params["b_hh_f"])
    h_b = run_dir(x[::-1], params["w_ih_b"], params["w_hh_b"],
                  params["b_ih_b"], params["b_hh_b"])
    final = jnp.concatenate([h_f, h_b], axis=1)
    return final @ params["w_fc"].T + params["b_fc"]


# -----------------------------------------------------------------------------
# Deterministic parameter init (shapes from the module's __init__).
# -----------------------------------------------------------------------------
def init_params(key, vocab, emb_dim, hidden_dim, num_classes):
    ks = jax.random.split(key, 12)
    k_gru = 1.0 / jnp.sqrt(hidden_dim)
    k_fc = 1.0 / jnp.sqrt(2 * hidden_dim)
    u = lambda k, shape, lim: jax.random.uniform(k, shape, jnp.float32, -lim, lim)
    return {
        # nn.Embedding(vocab, 300): N(0, 1)
        "embedding": jax.random.normal(ks[0], (vocab, emb_dim), jnp.float32),
        # nn.GRU(300, hidden_dim, bidirectional=True): U(-1/sqrt(H), 1/sqrt(H))
        "w_ih_f": u(ks[1], (3 * hidden_dim, emb_dim), k_gru),
        "w_hh_f": u(ks[2], (3 * hidden_dim, hidden_dim), k_gru),
        "b_ih_f": u(ks[3], (3 * hidden_dim,), k_gru),
        "b_hh_f": u(ks[4], (3 * hidden_dim,), k_gru),
        "w_ih_b": u(ks[5], (3 * hidden_dim, emb_dim), k_gru),
        "w_hh_b": u(ks[6], (3 * hidden_dim, hidden_dim), k_gru),
        "b_ih_b": u(ks[7], (3 * hidden_dim,), k_gru),
        "b_hh_b": u(ks[8], (3 * hidden_dim,), k_gru),
        # nn.Linear(2H, num_classes)
        "w_fc": u(ks[9], (num_classes, 2 * hidden_dim), k_fc),
        "b_fc": u(ks[10], (num_classes,), k_fc),
    }


if __name__ == "__main__":
    VOCAB = 100
    EMB = 300
    HIDDEN = 32
    NUM_CLASSES = 3
    BATCH = 2
    SEQ = 8

    key = jax.random.PRNGKey(0)
    k_param, k_tok = jax.random.split(key)
    params = init_params(k_param, VOCAB, EMB, HIDDEN, NUM_CLASSES)
    tokens = jax.random.randint(k_tok, (BATCH, SEQ), 0, VOCAB, dtype=jnp.int32)

    # One-time weight re-layout / bf16 cast (outside the jitted hot path).
    kparams = prepare_params(params, hidden_dim=HIDDEN, num_classes=NUM_CLASSES)

    out = sentiment_classifier_gru_forward(
        tokens, kparams, hidden_dim=HIDDEN, num_classes=NUM_CLASSES)
    out = jax.block_until_ready(out)

    ref = reference_forward(tokens, params, hidden_dim=HIDDEN,
                            num_classes=NUM_CLASSES)
    assert out.shape == (BATCH, NUM_CLASSES), out.shape
    # Tolerance loosened vs. rev 2: matmul operands are deliberately bf16 on
    # the MXU (f32 accumulation); the reference is pure f32.
    assert jnp.allclose(out, ref, rtol=5e-2, atol=5e-2), (out, ref)

    print("KERNEL_OK")
</pallas_src>

<mosaic_0001>
module attributes {stable_mosaic.version = 11 : i64} {
  func.func @kernel(%arg0: memref<64x300xbf16, #tpu.memory_space<vmem>>, %arg1: memref<300x384xbf16, #tpu.memory_space<vmem>>, %arg2: memref<1x384xf32, #tpu.memory_space<vmem>>, %arg3: memref<128x384xbf16, #tpu.memory_space<vmem>>, %arg4: memref<1x128xf32, #tpu.memory_space<vmem>>, %arg5: memref<128x128xbf16, #tpu.memory_space<vmem>>, %arg6: memref<1x128xf32, #tpu.memory_space<vmem>>, %arg7: memref<8x128xf32, #tpu.memory_space<vmem>>, %arg8: memref<64x384xf32, #tpu.memory_space<vmem>>) attributes {dimension_semantics = [], scalar_prefetch = 0 : i64, scratch_operands = 1 : i64, tpu.core_type = #tpu.core_type<tc>} {
    %c0 = arith.constant 0 : index
    %c0_0 = arith.constant 0 : index
    %0 = vector.load %arg0[%c0, %c0_0] : memref<64x300xbf16, #tpu.memory_space<vmem>>, vector<64x300xbf16>
    %c0_1 = arith.constant 0 : index
    %c0_2 = arith.constant 0 : index
    %1 = vector.load %arg1[%c0_1, %c0_2] : memref<300x384xbf16, #tpu.memory_space<vmem>>, vector<300x384xbf16>
    %cst = arith.constant dense<0.000000e+00> : vector<64x384xf32>
    %2 = tpu.matmul %0, %1, %cst {dimension_numbers = #tpu.dot_dimension_numbers<[1], [0], [0], [1], [0, 0, 1, 1], [], []>} : vector<64x300xbf16>, vector<300x384xbf16>, vector<64x384xf32> -> vector<64x384xf32>
    %c0_3 = arith.constant 0 : index
    %c0_4 = arith.constant 0 : index
    %3 = vector.load %arg2[%c0_3, %c0_4] : memref<1x384xf32, #tpu.memory_space<vmem>>, vector<1x384xf32>
    %4 = vector.broadcast %3 : vector<1x384xf32> to vector<64x384xf32>
    %5 = arith.addf %2, %4 : vector<64x384xf32>
    %c0_5 = arith.constant 0 : index
    %c0_6 = arith.constant 0 : index
    %6 = vector.load %arg8[%c0_5, %c0_6] : memref<64x384xf32, #tpu.memory_space<vmem>>, vector<64x384xf32>
    tpu.vector_store %arg8[%c0_5, %c0_6], %5 {strides = array<i32>} : memref<64x384xf32, #tpu.memory_space<vmem>>, vector<64x384xf32>,
    %c0_7 = arith.constant 0 : index
    %c0_8 = arith.constant 0 : index
    %7 = vector.load %arg3[%c0_7, %c0_8] : memref<128x384xbf16, #tpu.memory_space<vmem>>, vector<128x384xbf16>
    %c0_9 = arith.constant 0 : index
    %c0_10 = arith.constant 0 : index
    %8 = vector.load %arg4[%c0_9, %c0_10] : memref<1x128xf32, #tpu.memory_space<vmem>>, vector<1x128xf32>
    %9 = tpu.iota {dimensions = array<i32: 1>} : vector<8x384xi32>
    %c128_i32 = arith.constant 128 : i32
    %c0_i32 = arith.constant 0 : i32
    %10 = arith.cmpi eq, %c128_i32, %c0_i32 : i32
    %c1_i32 = arith.constant 1 : i32
    %11 = arith.select %10, %c1_i32, %c128_i32 : i32
    %12 = vector.broadcast %11 : i32 to vector<8x384xi32>
    %13 = arith.remsi %9, %12 : vector<8x384xi32>
    %c0_i32_11 = arith.constant 0 : i32
    %14 = vector.broadcast %c0_i32_11 : i32 to vector<8x384xi32>
    %15 = arith.cmpi ne, %13, %14 : vector<8x384xi32>
    %c0_i32_12 = arith.constant 0 : i32
    %16 = vector.broadcast %c0_i32_12 : i32 to vector<8x384xi32>
    %17 = arith.cmpi slt, %13, %16 : vector<8x384xi32>
    %c0_i32_13 = arith.constant 0 : i32
    %18 = arith.cmpi slt, %11, %c0_i32_13 : i32
    %19 = vector.broadcast %18 : i1 to vector<8x384xi1>
    %20 = vector.broadcast %19 : vector<8x384xi1> to vector<8x384xi1>
    %21 = arith.xori %17, %20 : vector<8x384xi1>
    %22 = arith.andi %21, %15 : vector<8x384xi1>
    %23 = vector.broadcast %11 : i32 to vector<8x384xi32>
    %24 = arith.addi %13, %23 : vector<8x384xi32>
    %25 = arith.select %22, %24, %13 : vector<8x384xi1>, vector<8x384xi32>
    %c32_i32 = arith.constant 32 : i32
    %26 = vector.broadcast %c32_i32 : i32 to vector<8x384xi32>
    %27 = arith.cmpi slt, %25, %26 : vector<8x384xi32>
    %cst_14 = arith.constant 0.000000e+00 : f32
    %28 = vector.broadcast %cst_14 : f32 to vector<8x128xf32>
    %c0_15 = arith.constant 0 : index
    %c0_16 = arith.constant 0 : index
    %29 = vector.load %arg8[%c0_15, %c0_16] : memref<64x384xf32, #tpu.memory_space<vmem>>, vector<8x384xf32>
    %c56 = arith.constant 56 : index
    %c0_17 = arith.constant 0 : index
    %30 = vector.load %arg8[%c56, %c0_17] : memref<64x384xf32, #tpu.memory_space<vmem>>, vector<8x384xf32>
    %31 = arith.select %27, %29, %30 : vector<8x384xi1>, vector<8x384xf32>
    %32 = arith.truncf %28 : vector<8x128xf32> to vector<8x128xbf16>
    %cst_18 = arith.constant dense<0.000000e+00> : vector<8x384xf32>
    %33 = tpu.matmul %32, %7, %cst_18 {dimension_numbers = #tpu.dot_dimension_numbers<[1], [0], [0], [1], [0, 0, 1, 1], [], []>} : vector<8x128xbf16>, vector<128x384xbf16>, vector<8x384xf32> -> vector<8x384xf32>
    %34 = vector.extract_strided_slice %31 {offsets = [0, 0], sizes = [8, 128], strides = [1, 1]} : vector<8x384xf32> to vector<8x128xf32>
    %35 = vector.extract_strided_slice %33 {offsets = [0, 0], sizes = [8, 128], strides = [1, 1]} : vector<8x384xf32> to vector<8x128xf32>
    %36 = arith.addf %34, %35 : vector<8x128xf32>
    %37 = arith.negf %36 : vector<8x128xf32>
    %38 = math.exp %37 : vector<8x128xf32>
    %cst_19 = arith.constant 1.000000e+00 : f32
    %39 = vector.broadcast %cst_19 : f32 to vector<8x128xf32>
    %40 = arith.addf %39, %38 : vector<8x128xf32>
    %41 = arith.divf %39, %40 : vector<8x128xf32>
    %42 = vector.extract_strided_slice %31 {offsets = [0, 128], sizes = [8, 128], strides = [1, 1]} : vector<8x384xf32> to vector<8x128xf32>
    %43 = vector.extract_strided_slice %33 {offsets = [0, 128], sizes = [8, 128], strides = [1, 1]} : vector<8x384xf32> to vector<8x128xf32>
    %44 = arith.addf %42, %43 : vector<8x128xf32>
    %45 = arith.negf %44 : vector<8x128xf32>
    %46 = math.exp %45 : vector<8x128xf32>
    %cst_20 = arith.constant 1.000000e+00 : f32
    %47 = vector.broadcast %cst_20 : f32 to vector<8x128xf32>
    %48 = arith.addf %47, %46 : vector<8x128xf32>
    %49 = arith.divf %47, %48 : vector<8x128xf32>
    %50 = vector.extract_strided_slice %31 {offsets = [0, 256], sizes = [8, 128], strides = [1, 1]} : vector<8x384xf32> to vector<8x128xf32>
    %51 = vector.extract_strided_slice %33 {offsets = [0, 256], sizes = [8, 128], strides = [1, 1]} : vector<8x384xf32> to vector<8x128xf32>
    %52 = vector.broadcast %8 : vector<1x128xf32> to vector<8x128xf32>
    %53 = arith.addf %51, %52 : vector<8x128xf32>
    %54 = arith.mulf %41, %53 : vector<8x128xf32>
    %55 = arith.addf %50, %54 : vector<8x128xf32>
    %56 = math.tanh %55 : vector<8x128xf32>
    %cst_21 = arith.constant 1.000000e+00 : f32
    %57 = vector.broadcast %cst_21 : f32 to vector<8x128xf32>
    %58 = arith.subf %57, %49 : vector<8x128xf32>
    %59 = arith.mulf %58, %56 : vector<8x128xf32>
    %60 = arith.mulf %49, %28 : vector<8x128xf32>
    %61 = arith.addf %59, %60 : vector<8x128xf32>
    %c8 = arith.constant 8 : index
    %c0_22 = arith.constant 0 : index
    %62 = vector.load %arg8[%c8, %c0_22] : memref<64x384xf32, #tpu.memory_space<vmem>>, vector<8x384xf32>
    %c48 = arith.constant 48 : index
    %c0_23 = arith.constant 0 : index
    %63 = vector.load %arg8[%c48, %c0_23] : memref<64x384xf32, #tpu.memory_space<vmem>>, vector<8x384xf32>
    %64 = arith.select %27, %62, %63 : vector<8x384xi1>, vector<8x384xf32>
    %65 = arith.truncf %61 : vector<8x128xf32> to vector<8x128xbf16>
    %cst_24 = arith.constant dense<0.000000e+00> : vector<8x384xf32>
    %66 = tpu.matmul %65, %7, %cst_24 {dimension_numbers = #tpu.dot_dimension_numbers<[1], [0], [0], [1], [0, 0, 1, 1], [], []>} : vector<8x128xbf16>, vector<128x384xbf16>, vector<8x384xf32> -> vector<8x384xf32>
    %67 = vector.extract_strided_slice %64 {offsets = [0, 0], sizes = [8, 128], strides = [1, 1]} : vector<8x384xf32> to vector<8x128xf32>
    %68 = vector.extract_strided_slice %66 {offsets = [0, 0], sizes = [8, 128], strides = [1, 1]} : vector<8x384xf32> to vector<8x128xf32>
    %69 = arith.addf %67, %68 : vector<8x128xf32>
    %70 = arith.negf %69 : vector<8x128xf32>
    %71 = math.exp %70 : vector<8x128xf32>
    %cst_25 = arith.constant 1.000000e+00 : f32
    %72 = vector.broadcast %cst_25 : f32 to vector<8x128xf32>
    %73 = arith.addf %72, %71 : vector<8x128xf32>
    %74 = arith.divf %72, %73 : vector<8x128xf32>
    %75 = vector.extract_strided_slice %64 {offsets = [0, 128], sizes = [8, 128], strides = [1, 1]} : vector<8x384xf32> to vector<8x128xf32>
    %76 = vector.extract_strided_slice %66 {offsets = [0, 128], sizes = [8, 128], strides = [1, 1]} : vector<8x384xf32> to vector<8x128xf32>
    %77 = arith.addf %75, %76 : vector<8x128xf32>
    %78 = arith.negf %77 : vector<8x128xf32>
    %79 = math.exp %78 : vector<8x128xf32>
    %cst_26 = arith.constant 1.000000e+00 : f32
    %80 = vector.broadcast %cst_26 : f32 to vector<8x128xf32>
    %81 = arith.addf %80, %79 : vector<8x128xf32>
    %82 = arith.divf %80, %81 : vector<8x128xf32>
    %83 = vector.extract_strided_slice %64 {offsets = [0, 256], sizes = [8, 128], strides = [1, 1]} : vector<8x384xf32> to vector<8x128xf32>
    %84 = vector.extract_strided_slice %66 {offsets = [0, 256], sizes = [8, 128], strides = [1, 1]} : vector<8x384xf32> to vector<8x128xf32>
    %85 = vector.broadcast %8 : vector<1x128xf32> to vector<8x128xf32>
    %86 = arith.addf %84, %85 : vector<8x128xf32>
    %87 = arith.mulf %74, %86 : vector<8x128xf32>
    %88 = arith.addf %83, %87 : vector<8x128xf32>
    %89 = math.tanh %88 : vector<8x128xf32>
    %cst_27 = arith.constant 1.000000e+00 : f32
    %90 = vector.broadcast %cst_27 : f32 to vector<8x128xf32>
    %91 = arith.subf %90, %82 : vector<8x128xf32>
    %92 = arith.mulf %91, %89 : vector<8x128xf32>
    %93 = arith.mulf %82, %61 : vector<8x128xf32>
    %94 = arith.addf %92, %93 : vector<8x128xf32>
    %c16 = arith.constant 16 : index
    %c0_28 = arith.constant 0 : index
    %95 = vector.load %arg8[%c16, %c0_28] : memref<64x384xf32, #tpu.memory_space<vmem>>, vector<8x384xf32>
    %c40 = arith.constant 40 : index
    %c0_29 = arith.constant 0 : index
    %96 = vector.load %arg8[%c40, %c0_29] : memref<64x384xf32, #tpu.memory_space<vmem>>, vector<8x384xf32>
    %97 = arith.select %27, %95, %96 : vector<8x384xi1>, vector<8x384xf32>
    %98 = arith.truncf %94 : vector<8x128xf32> to vector<8x128xbf16>
    %cst_30 = arith.constant dense<0.000000e+00> : vector<8x384xf32>
    %99 = tpu.matmul %98, %7, %cst_30 {dimension_numbers = #tpu.dot_dimension_numbers<[1], [0], [0], [1], [0, 0, 1, 1], [], []>} : vector<8x128xbf16>, vector<128x384xbf16>, vector<8x384xf32> -> vector<8x384xf32>
    %100 = vector.extract_strided_slice %97 {offsets = [0, 0], sizes = [8, 128], strides = [1, 1]} : vector<8x384xf32> to vector<8x128xf32>
    %101 = vector.extract_strided_slice %99 {offsets = [0, 0], sizes = [8, 128], strides = [1, 1]} : vector<8x384xf32> to vector<8x128xf32>
    %102 = arith.addf %100, %101 : vector<8x128xf32>
    %103 = arith.negf %102 : vector<8x128xf32>
    %104 = math.exp %103 : vector<8x128xf32>
    %cst_31 = arith.constant 1.000000e+00 : f32
    %105 = vector.broadcast %cst_31 : f32 to vector<8x128xf32>
    %106 = arith.addf %105, %104 : vector<8x128xf32>
    %107 = arith.divf %105, %106 : vector<8x128xf32>
    %108 = vector.extract_strided_slice %97 {offsets = [0, 128], sizes = [8, 128], strides = [1, 1]} : vector<8x384xf32> to vector<8x128xf32>
    %109 = vector.extract_strided_slice %99 {offsets = [0, 128], sizes = [8, 128], strides = [1, 1]} : vector<8x384xf32> to vector<8x128xf32>
    %110 = arith.addf %108, %109 : vector<8x128xf32>
    %111 = arith.negf %110 : vector<8x128xf32>
    %112 = math.exp %111 : vector<8x128xf32>
    %cst_32 = arith.constant 1.000000e+00 : f32
    %113 = vector.broadcast %cst_32 : f32 to vector<8x128xf32>
    %114 = arith.addf %113, %112 : vector<8x128xf32>
    %115 = arith.divf %113, %114 : vector<8x128xf32>
    %116 = vector.extract_strided_slice %97 {offsets = [0, 256], sizes = [8, 128], strides = [1, 1]} : vector<8x384xf32> to vector<8x128xf32>
    %117 = vector.extract_strided_slice %99 {offsets = [0, 256], sizes = [8, 128], strides = [1, 1]} : vector<8x384xf32> to vector<8x128xf32>
    %118 = vector.broadcast %8 : vector<1x128xf32> to vector<8x128xf32>
    %119 = arith.addf %117, %118 : vector<8x128xf32>
    %120 = arith.mulf %107, %119 : vector<8x128xf32>
    %121 = arith.addf %116, %120 : vector<8x128xf32>
    %122 = math.tanh %121 : vector<8x128xf32>
    %cst_33 = arith.constant 1.000000e+00 : f32
    %123 = vector.broadcast %cst_33 : f32 to vector<8x128xf32>
    %124 = arith.subf %123, %115 : vector<8x128xf32>
    %125 = arith.mulf %124, %122 : vector<8x128xf32>
    %126 = arith.mulf %115, %94 : vector<8x128xf32>
    %127 = arith.addf %125, %126 : vector<8x128xf32>
    %c24 = arith.constant 24 : index
    %c0_34 = arith.constant 0 : index
    %128 = vector.load %arg8[%c24, %c0_34] : memref<64x384xf32, #tpu.memory_space<vmem>>, vector<8x384xf32>
    %c32 = arith.constant 32 : index
    %c0_35 = arith.constant 0 : index
    %129 = vector.load %arg8[%c32, %c0_35] : memref<64x384xf32, #tpu.memory_space<vmem>>, vector<8x384xf32>
    %130 = arith.select %27, %128, %129 : vector<8x384xi1>, vector<8x384xf32>
    %131 = arith.truncf %127 : vector<8x128xf32> to vector<8x128xbf16>
    %cst_36 = arith.constant dense<0.000000e+00> : vector<8x384xf32>
    %132 = tpu.matmul %131, %7, %cst_36 {dimension_numbers = #tpu.dot_dimension_numbers<[1], [0], [0], [1], [0, 0, 1, 1], [], []>} : vector<8x128xbf16>, vector<128x384xbf16>, vector<8x384xf32> -> vector<8x384xf32>
    %133 = vector.extract_strided_slice %130 {offsets = [0, 0], sizes = [8, 128], strides = [1, 1]} : vector<8x384xf32> to vector<8x128xf32>
    %134 = vector.extract_strided_slice %132 {offsets = [0, 0], sizes = [8, 128], strides = [1, 1]} : vector<8x384xf32> to vector<8x128xf32>
    %135 = arith.addf %133, %134 : vector<8x128xf32>
    %136 = arith.negf %135 : vector<8x128xf32>
    %137 = math.exp %136 : vector<8x128xf32>
    %cst_37 = arith.constant 1.000000e+00 : f32
    %138 = vector.broadcast %cst_37 : f32 to vector<8x128xf32>
    %139 = arith.addf %138, %137 : vector<8x128xf32>
    %140 = arith.divf %138, %139 : vector<8x128xf32>
    %141 = vector.extract_strided_slice %130 {offsets = [0, 128], sizes = [8, 128], strides = [1, 1]} : vector<8x384xf32> to vector<8x128xf32>
    %142 = vector.extract_strided_slice %132 {offsets = [0, 128], sizes = [8, 128], strides = [1, 1]} : vector<8x384xf32> to vector<8x128xf32>
    %143 = arith.addf %141, %142 : vector<8x128xf32>
    %144 = arith.negf %143 : vector<8x128xf32>
    %145 = math.exp %144 : vector<8x128xf32>
    %cst_38 = arith.constant 1.000000e+00 : f32
    %146 = vector.broadcast %cst_38 : f32 to vector<8x128xf32>
    %147 = arith.addf %146, %145 : vector<8x128xf32>
    %148 = arith.divf %146, %147 : vector<8x128xf32>
    %149 = vector.extract_strided_slice %130 {offsets = [0, 256], sizes = [8, 128], strides = [1, 1]} : vector<8x384xf32> to vector<8x128xf32>
    %150 = vector.extract_strided_slice %132 {offsets = [0, 256], sizes = [8, 128], strides = [1, 1]} : vector<8x384xf32> to vector<8x128xf32>
    %151 = vector.broadcast %8 : vector<1x128xf32> to vector<8x128xf32>
    %152 = arith.addf %150, %151 : vector<8x128xf32>
    %153 = arith.mulf %140, %152 : vector<8x128xf32>
    %154 = arith.addf %149, %153 : vector<8x128xf32>
    %155 = math.tanh %154 : vector<8x128xf32>
    %cst_39 = arith.constant 1.000000e+00 : f32
    %156 = vector.broadcast %cst_39 : f32 to vector<8x128xf32>
    %157 = arith.subf %156, %148 : vector<8x128xf32>
    %158 = arith.mulf %157, %155 : vector<8x128xf32>
    %159 = arith.mulf %148, %127 : vector<8x128xf32>
    %160 = arith.addf %158, %159 : vector<8x128xf32>
    %c32_40 = arith.constant 32 : index
    %c0_41 = arith.constant 0 : index
    %161 = vector.load %arg8[%c32_40, %c0_41] : memref<64x384xf32, #tpu.memory_space<vmem>>, vector<8x384xf32>
    %c24_42 = arith.constant 24 : index
    %c0_43 = arith.constant 0 : index
    %162 = vector.load %arg8[%c24_42, %c0_43] : memref<64x384xf32, #tpu.memory_space<vmem>>, vector<8x384xf32>
    %163 = arith.select %27, %161, %162 : vector<8x384xi1>, vector<8x384xf32>
    %164 = arith.truncf %160 : vector<8x128xf32> to vector<8x128xbf16>
    %cst_44 = arith.constant dense<0.000000e+00> : vector<8x384xf32>
    %165 = tpu.matmul %164, %7, %cst_44 {dimension_numbers = #tpu.dot_dimension_numbers<[1], [0], [0], [1], [0, 0, 1, 1], [], []>} : vector<8x128xbf16>, vector<128x384xbf16>, vector<8x384xf32> -> vector<8x384xf32>
    %166 = vector.extract_strided_slice %163 {offsets = [0, 0], sizes = [8, 128], strides = [1, 1]} : vector<8x384xf32> to vector<8x128xf32>
    %167 = vector.extract_strided_slice %165 {offsets = [0, 0], sizes = [8, 128], strides = [1, 1]} : vector<8x384xf32> to vector<8x128xf32>
    %168 = arith.addf %166, %167 : vector<8x128xf32>
    %169 = arith.negf %168 : vector<8x128xf32>
    %170 = math.exp %169 : vector<8x128xf32>
    %cst_45 = arith.constant 1.000000e+00 : f32
    %171 = vector.broadcast %cst_45 : f32 to vector<8x128xf32>
    %172 = arith.addf %171, %170 : vector<8x128xf32>
    %173 = arith.divf %171, %172 : vector<8x128xf32>
    %174 = vector.extract_strided_slice %163 {offsets = [0, 128], sizes = [8, 128], strides = [1, 1]} : vector<8x384xf32> to vector<8x128xf32>
    %175 = vector.extract_strided_slice %165 {offsets = [0, 128], sizes = [8, 128], strides = [1, 1]} : vector<8x384xf32> to vector<8x128xf32>
    %176 = arith.addf %174, %175 : vector<8x128xf32>
    %177 = arith.negf %176 : vector<8x128xf32>
    %178 = math.exp %177 : vector<8x128xf32>
    %cst_46 = arith.constant 1.000000e+00 : f32
    %179 = vector.broadcast %cst_46 : f32 to vector<8x128xf32>
    %180 = arith.addf %179, %178 : vector<8x128xf32>
    %181 = arith.divf %179, %180 : vector<8x128xf32>
    %182 = vector.extract_strided_slice %163 {offsets = [0, 256], sizes = [8, 128], strides = [1, 1]} : vector<8x384xf32> to vector<8x128xf32>
    %183 = vector.extract_strided_slice %165 {offsets = [0, 256], sizes = [8, 128], strides = [1, 1]} : vector<8x384xf32> to vector<8x128xf32>
    %184 = vector.broadcast %8 : vector<1x128xf32> to vector<8x128xf32>
    %185 = arith.addf %183, %184 : vector<8x128xf32>
    %186 = arith.mulf %173, %185 : vector<8x128xf32>
    %187 = arith.addf %182, %186 : vector<8x128xf32>
    %188 = math.tanh %187 : vector<8x128xf32>
    %cst_47 = arith.constant 1.000000e+00 : f32
    %189 = vector.broadcast %cst_47 : f32 to vector<8x128xf32>
    %190 = arith.subf %189, %181 : vector<8x128xf32>
    %191 = arith.mulf %190, %188 : vector<8x128xf32>
    %192 = arith.mulf %181, %160 : vector<8x128xf32>
    %193 = arith.addf %191, %192 : vector<8x128xf32>
    %c40_48 = arith.constant 40 : index
    %c0_49 = arith.constant 0 : index
    %194 = vector.load %arg8[%c40_48, %c0_49] : memref<64x384xf32, #tpu.memory_space<vmem>>, vector<8x384xf32>
    %c16_50 = arith.constant 16 : index
    %c0_51 = arith.constant 0 : index
    %195 = vector.load %arg8[%c16_50, %c0_51] : memref<64x384xf32, #tpu.memory_space<vmem>>, vector<8x384xf32>
    %196 = arith.select %27, %194, %195 : vector<8x384xi1>, vector<8x384xf32>
    %197 = arith.truncf %193 : vector<8x128xf32> to vector<8x128xbf16>
    %cst_52 = arith.constant dense<0.000000e+00> : vector<8x384xf32>
    %198 = tpu.matmul %197, %7, %cst_52 {dimension_numbers = #tpu.dot_dimension_numbers<[1], [0], [0], [1], [0, 0, 1, 1], [], []>} : vector<8x128xbf16>, vector<128x384xbf16>, vector<8x384xf32> -> vector<8x384xf32>
    %199 = vector.extract_strided_slice %196 {offsets = [0, 0], sizes = [8, 128], strides = [1, 1]} : vector<8x384xf32> to vector<8x128xf32>
    %200 = vector.extract_strided_slice %198 {offsets = [0, 0], sizes = [8, 128], strides = [1, 1]} : vector<8x384xf32> to vector<8x128xf32>
    %201 = arith.addf %199, %200 : vector<8x128xf32>
    %202 = arith.negf %201 : vector<8x128xf32>
    %203 = math.exp %202 : vector<8x128xf32>
    %cst_53 = arith.constant 1.000000e+00 : f32
    %204 = vector.broadcast %cst_53 : f32 to vector<8x128xf32>
    %205 = arith.addf %204, %203 : vector<8x128xf32>
    %206 = arith.divf %204, %205 : vector<8x128xf32>
    %207 = vector.extract_strided_slice %196 {offsets = [0, 128], sizes = [8, 128], strides = [1, 1]} : vector<8x384xf32> to vector<8x128xf32>
    %208 = vector.extract_strided_slice %198 {offsets = [0, 128], sizes = [8, 128], strides = [1, 1]} : vector<8x384xf32> to vector<8x128xf32>
    %209 = arith.addf %207, %208 : vector<8x128xf32>
    %210 = arith.negf %209 : vector<8x128xf32>
    %211 = math.exp %210 : vector<8x128xf32>
    %cst_54 = arith.constant 1.000000e+00 : f32
    %212 = vector.broadcast %cst_54 : f32 to vector<8x128xf32>
    %213 = arith.addf %212, %211 : vector<8x128xf32>
    %214 = arith.divf %212, %213 : vector<8x128xf32>
    %215 = vector.extract_strided_slice %196 {offsets = [0, 256], sizes = [8, 128], strides = [1, 1]} : vector<8x384xf32> to vector<8x128xf32>
    %216 = vector.extract_strided_slice %198 {offsets = [0, 256], sizes = [8, 128], strides = [1, 1]} : vector<8x384xf32> to vector<8x128xf32>
    %217 = vector.broadcast %8 : vector<1x128xf32> to vector<8x128xf32>
    %218 = arith.addf %216, %217 : vector<8x128xf32>
    %219 = arith.mulf %206, %218 : vector<8x128xf32>
    %220 = arith.addf %215, %219 : vector<8x128xf32>
    %221 = math.tanh %220 : vector<8x128xf32>
    %cst_55 = arith.constant 1.000000e+00 : f32
    %222 = vector.broadcast %cst_55 : f32 to vector<8x128xf32>
    %223 = arith.subf %222, %214 : vector<8x128xf32>
    %224 = arith.mulf %223, %221 : vector<8x128xf32>
    %225 = arith.mulf %214, %193 : vector<8x128xf32>
    %226 = arith.addf %224, %225 : vector<8x128xf32>
    %c48_56 = arith.constant 48 : index
    %c0_57 = arith.constant 0 : index
    %227 = vector.load %arg8[%c48_56, %c0_57] : memref<64x384xf32, #tpu.memory_space<vmem>>, vector<8x384xf32>
    %c8_58 = arith.constant 8 : index
    %c0_59 = arith.constant 0 : index
    %228 = vector.load %arg8[%c8_58, %c0_59] : memref<64x384xf32, #tpu.memory_space<vmem>>, vector<8x384xf32>
    %229 = arith.select %27, %227, %228 : vector<8x384xi1>, vector<8x384xf32>
    %230 = arith.truncf %226 : vector<8x128xf32> to vector<8x128xbf16>
    %cst_60 = arith.constant dense<0.000000e+00> : vector<8x384xf32>
    %231 = tpu.matmul %230, %7, %cst_60 {dimension_numbers = #tpu.dot_dimension_numbers<[1], [0], [0], [1], [0, 0, 1, 1], [], []>} : vector<8x128xbf16>, vector<128x384xbf16>, vector<8x384xf32> -> vector<8x384xf32>
    %232 = vector.extract_strided_slice %229 {offsets = [0, 0], sizes = [8, 128], strides = [1, 1]} : vector<8x384xf32> to vector<8x128xf32>
    %233 = vector.extract_strided_slice %231 {offsets = [0, 0], sizes = [8, 128], strides = [1, 1]} : vector<8x384xf32> to vector<8x128xf32>
    %234 = arith.addf %232, %233 : vector<8x128xf32>
    %235 = arith.negf %234 : vector<8x128xf32>
    %236 = math.exp %235 : vector<8x128xf32>
    %cst_61 = arith.constant 1.000000e+00 : f32
    %237 = vector.broadcast %cst_61 : f32 to vector<8x128xf32>
    %238 = arith.addf %237, %236 : vector<8x128xf32>
    %239 = arith.divf %237, %238 : vector<8x128xf32>
    %240 = vector.extract_strided_slice %229 {offsets = [0, 128], sizes = [8, 128], strides = [1, 1]} : vector<8x384xf32> to vector<8x128xf32>
    %241 = vector.extract_strided_slice %231 {offsets = [0, 128], sizes = [8, 128], strides = [1, 1]} : vector<8x384xf32> to vector<8x128xf32>
    %242 = arith.addf %240, %241 : vector<8x128xf32>
    %243 = arith.negf %242 : vector<8x128xf32>
    %244 = math.exp %243 : vector<8x128xf32>
    %cst_62 = arith.constant 1.000000e+00 : f32
    %245 = vector.broadcast %cst_62 : f32 to vector<8x128xf32>
    %246 = arith.addf %245, %244 : vector<8x128xf32>
    %247 = arith.divf %245, %246 : vector<8x128xf32>
    %248 = vector.extract_strided_slice %229 {offsets = [0, 256], sizes = [8, 128], strides = [1, 1]} : vector<8x384xf32> to vector<8x128xf32>
    %249 = vector.extract_strided_slice %231 {offsets = [0, 256], sizes = [8, 128], strides = [1, 1]} : vector<8x384xf32> to vector<8x128xf32>
    %250 = vector.broadcast %8 : vector<1x128xf32> to vector<8x128xf32>
    %251 = arith.addf %249, %250 : vector<8x128xf32>
    %252 = arith.mulf %239, %251 : vector<8x128xf32>
    %253 = arith.addf %248, %252 : vector<8x128xf32>
    %254 = math.tanh %253 : vector<8x128xf32>
    %cst_63 = arith.constant 1.000000e+00 : f32
    %255 = vector.broadcast %cst_63 : f32 to vector<8x128xf32>
    %256 = arith.subf %255, %247 : vector<8x128xf32>
    %257 = arith.mulf %256, %254 : vector<8x128xf32>
    %258 = arith.mulf %247, %226 : vector<8x128xf32>
    %259 = arith.addf %257, %258 : vector<8x128xf32>
    %c56_64 = arith.constant 56 : index
    %c0_65 = arith.constant 0 : index
    %260 = vector.load %arg8[%c56_64, %c0_65] : memref<64x384xf32, #tpu.memory_space<vmem>>, vector<8x384xf32>
    %c0_66 = arith.constant 0 : index
    %c0_67 = arith.constant 0 : index
    %261 = vector.load %arg8[%c0_66, %c0_67] : memref<64x384xf32, #tpu.memory_space<vmem>>, vector<8x384xf32>
    %262 = arith.select %27, %260, %261 : vector<8x384xi1>, vector<8x384xf32>
    %263 = arith.truncf %259 : vector<8x128xf32> to vector<8x128xbf16>
    %cst_68 = arith.constant dense<0.000000e+00> : vector<8x384xf32>
    %264 = tpu.matmul %263, %7, %cst_68 {dimension_numbers = #tpu.dot_dimension_numbers<[1], [0], [0], [1], [0, 0, 1, 1], [], []>} : vector<8x128xbf16>, vector<128x384xbf16>, vector<8x384xf32> -> vector<8x384xf32>
    %265 = vector.extract_strided_slice %262 {offsets = [0, 0], sizes = [8, 128], strides = [1, 1]} : vector<8x384xf32> to vector<8x128xf32>
    %266 = vector.extract_strided_slice %264 {offsets = [0, 0], sizes = [8, 128], strides = [1, 1]} : vector<8x384xf32> to vector<8x128xf32>
    %267 = arith.addf %265, %266 : vector<8x128xf32>
    %268 = arith.negf %267 : vector<8x128xf32>
    %269 = math.exp %268 : vector<8x128xf32>
    %cst_69 = arith.constant 1.000000e+00 : f32
    %270 = vector.broadcast %cst_69 : f32 to vector<8x128xf32>
    %271 = arith.addf %270, %269 : vector<8x128xf32>
    %272 = arith.divf %270, %271 : vector<8x128xf32>
    %273 = vector.extract_strided_slice %262 {offsets = [0, 128], sizes = [8, 128], strides = [1, 1]} : vector<8x384xf32> to vector<8x128xf32>
    %274 = vector.extract_strided_slice %264 {offsets = [0, 128], sizes = [8, 128], strides = [1, 1]} : vector<8x384xf32> to vector<8x128xf32>
    %275 = arith.addf %273, %274 : vector<8x128xf32>
    %276 = arith.negf %275 : vector<8x128xf32>
    %277 = math.exp %276 : vector<8x128xf32>
    %cst_70 = arith.constant 1.000000e+00 : f32
    %278 = vector.broadcast %cst_70 : f32 to vector<8x128xf32>
    %279 = arith.addf %278, %277 : vector<8x128xf32>
    %280 = arith.divf %278, %279 : vector<8x128xf32>
    %281 = vector.extract_strided_slice %262 {offsets = [0, 256], sizes = [8, 128], strides = [1, 1]} : vector<8x384xf32> to vector<8x128xf32>
    %282 = vector.extract_strided_slice %264 {offsets = [0, 256], sizes = [8, 128], strides = [1, 1]} : vector<8x384xf32> to vector<8x128xf32>
    %283 = vector.broadcast %8 : vector<1x128xf32> to vector<8x128xf32>
    %284 = arith.addf %282, %283 : vector<8x128xf32>
    %285 = arith.mulf %272, %284 : vector<8x128xf32>
    %286 = arith.addf %281, %285 : vector<8x128xf32>
    %287 = math.tanh %286 : vector<8x128xf32>
    %cst_71 = arith.constant 1.000000e+00 : f32
    %288 = vector.broadcast %cst_71 : f32 to vector<8x128xf32>
    %289 = arith.subf %288, %280 : vector<8x128xf32>
    %290 = arith.mulf %289, %287 : vector<8x128xf32>
    %291 = arith.mulf %280, %259 : vector<8x128xf32>
    %292 = arith.addf %290, %291 : vector<8x128xf32>
    %293 = arith.truncf %292 : vector<8x128xf32> to vector<8x128xbf16>
    %c0_72 = arith.constant 0 : index
    %c0_73 = arith.constant 0 : index
    %294 = vector.load %arg5[%c0_72, %c0_73] : memref<128x128xbf16, #tpu.memory_space<vmem>>, vector<128x128xbf16>
    %cst_74 = arith.constant dense<0.000000e+00> : vector<8x128xf32>
    %295 = tpu.matmul %293, %294, %cst_74 {dimension_numbers = #tpu.dot_dimension_numbers<[1], [0], [0], [1], [0, 0, 1, 1], [], []>} : vector<8x128xbf16>, vector<128x128xbf16>, vector<8x128xf32> -> vector<8x128xf32>
    %c0_75 = arith.constant 0 : index
    %c0_76 = arith.constant 0 : index
    %296 = vector.load %arg6[%c0_75, %c0_76] : memref<1x128xf32, #tpu.memory_space<vmem>>, vector<1x128xf32>
    %297 = vector.broadcast %296 : vector<1x128xf32> to vector<8x128xf32>
    %298 = arith.addf %295, %297 : vector<8x128xf32>
    %c0_77 = arith.constant 0 : index
    %c0_78 = arith.constant 0 : index
    %299 = vector.load %arg7[%c0_77, %c0_78] : memref<8x128xf32, #tpu.memory_space<vmem>>, vector<8x128xf32>
    tpu.vector_store %arg7[%c0_77, %c0_78], %298 {strides = array<i32>} : memref<8x128xf32, #tpu.memory_space<vmem>>, vector<8x128xf32>,
    return
  }
}

</mosaic_0001>

<llo_original>
// kernel: sentiment_classifier_gru_forward.1
$region0: #{sentiment_classifier_gru_forward.1}
  #allocation0 [shape = 'u32[]', space=smem, size = 0x4, offset = 0x4, fixed_abs, tag = 'smem constant byte address 0x4 - core index']
  #allocation1 [shape = 'u32[144,128]{1,0:T(1,128)}', space=vmem, size = 0x12000, scoped, tag = 'internal scratch']
  #allocation2 [shape = 'f32[64,384]{1,0:T(8,128)}', space=vmem, size = 0x18000, scoped, tag = 'scratch operand']
  %s0 = inlined_call_operand.vmem [shape: bf16[64,300], index: 0, kind: input, shape index: {}]
  %s1 = inlined_call_operand.vmem [shape: bf16[300,384], index: 1, kind: input, shape index: {}]
  %s2 = inlined_call_operand.vmem [shape: f32[1,384], index: 2, kind: input, shape index: {}]
  %s3 = inlined_call_operand.vmem [shape: bf16[128,384], index: 3, kind: input, shape index: {}]
  %s4 = inlined_call_operand.vmem [shape: f32[1,128], index: 4, kind: input, shape index: {}]
  %s5 = inlined_call_operand.vmem [shape: bf16[128,128], index: 5, kind: input, shape index: {}]
  %s6 = inlined_call_operand.vmem [shape: f32[1,128], index: 6, kind: input, shape index: {}]
  %s7 = inlined_call_operand.vmem [shape: f32[8,128], index: 7, kind: output, shape index: {}]
  %s8 = sld [smem:[#allocation0]]
  $region38: #{sentiment_classifier_gru_forward.1} parent=0
    _
  %s10 = ssub.s32 1, %s8
  %s11 = scalar_select 0, %s10, %s8
  // Predicated region
  $region2: #{sentiment_classifier_gru_forward.1} parent=0 // pred_check
    _
  $region3: #{sentiment_classifier_gru_forward.1} parent=0 // pred_check_branch
    %13 = sbr.rel (0) target = $region5
  $region4: #{sentiment_classifier_gru_forward.1} parent=0 // pred_region
    _
  $region5: #{sentiment_classifier_gru_forward.1} parent=0 // pred_fallthru
    _
  // Predicated region
  $region6: #{sentiment_classifier_gru_forward.1} parent=0 // pred_check
    _
  $region7: #{sentiment_classifier_gru_forward.1} parent=0 // pred_check_branch
    %15 = sbr.rel (0) target = $region9
  $region8: #{sentiment_classifier_gru_forward.1} parent=0 // pred_region
    _
  $region9: #{sentiment_classifier_gru_forward.1} parent=0 // pred_fallthru
    _
  // Predicated region
  $region10: #{sentiment_classifier_gru_forward.1} parent=0 // pred_check
    _
  $region11: #{sentiment_classifier_gru_forward.1} parent=0 // pred_check_branch
    %17 = sbr.rel (0) target = $region13
  $region12: #{sentiment_classifier_gru_forward.1} parent=0 // pred_region
    _
  $region13: #{sentiment_classifier_gru_forward.1} parent=0 // pred_fallthru
    _
  // Predicated region
  $region14: #{sentiment_classifier_gru_forward.1} parent=0 // pred_check
    _
  $region15: #{sentiment_classifier_gru_forward.1} parent=0 // pred_check_branch
    %19 = sbr.rel (0) target = $region17
  $region16: #{sentiment_classifier_gru_forward.1} parent=0 // pred_region
    _
  $region17: #{sentiment_classifier_gru_forward.1} parent=0 // pred_fallthru
    _
  // Predicated region
  $region18: #{sentiment_classifier_gru_forward.1} parent=0 // pred_check
    _
  $region19: #{sentiment_classifier_gru_forward.1} parent=0 // pred_check_branch
    %21 = sbr.rel (0) target = $region21
  $region20: #{sentiment_classifier_gru_forward.1} parent=0 // pred_region
    _
  $region21: #{sentiment_classifier_gru_forward.1} parent=0 // pred_fallthru
    _
  // Predicated region
  $region22: #{sentiment_classifier_gru_forward.1} parent=0 // pred_check
    _
  $region23: #{sentiment_classifier_gru_forward.1} parent=0 // pred_check_branch
    %23 = sbr.rel (0) target = $region25
  $region24: #{sentiment_classifier_gru_forward.1} parent=0 // pred_region
    _
  $region25: #{sentiment_classifier_gru_forward.1} parent=0 // pred_fallthru
    _
  // Predicated region
  $region26: #{sentiment_classifier_gru_forward.1} parent=0 // pred_check
    _
  $region27: #{sentiment_classifier_gru_forward.1} parent=0 // pred_check_branch
    %25 = sbr.rel (0) target = $region29
  $region28: #{sentiment_classifier_gru_forward.1} parent=0 // pred_region
    _
  $region29: #{sentiment_classifier_gru_forward.1} parent=0 // pred_fallthru
    _
  %v27 = vld [vmem:[%s0] sm:$0xff]
  %v28 = vld [vmem:[%s0 + $0x8] sm:$0xf]
  %v29 = vld [vmem:[%s0 + $0xc] sm:$0xff]
  %v30 = vld [vmem:[%s0 + $0x14] sm:$0xf]
  %v31 = vld [vmem:[%s0 + $0x18] sm:$0xff]
  %v32 = vld [vmem:[%s0 + $0x20] sm:$0xf]
  %v33 = vld [vmem:[%s0 + $0x24] sm:$0xff]
  %v34 = vld [vmem:[%s0 + $0x2c] sm:$0xf]
  %v35 = vld [vmem:[%s0 + $0x30] sm:$0xff]
  %v36 = vld [vmem:[%s0 + $0x38] sm:$0xf]
  %v37 = vld [vmem:[%s0 + $0x3c] sm:$0xff]
  %v38 = vld [vmem:[%s0 + $0x44] sm:$0xf]
  %v39 = vld [vmem:[%s0 + $0x48] sm:$0xff]
  %v40 = vld [vmem:[%s0 + $0x50] sm:$0xf]
  %v41 = vld [vmem:[%s0 + $0x54] sm:$0xff]
  %v42 = vld [vmem:[%s0 + $0x5c] sm:$0xf]
  %v43 = vld [vmem:[%s1] sm:$0xff]
  %v44 = vld [vmem:[%s1 + $0x8] sm:$0xf]
  %v45 = vld [vmem:[%s1 + $0xc] sm:$0xff]
  %v46 = vld [vmem:[%s1 + $0x14] sm:$0xf]
  %v47 = vld [vmem:[%s1 + $0x18] sm:$0xff]
  %v48 = vld [vmem:[%s1 + $0x20] sm:$0xf]
  %v49 = vld [vmem:[%s1 + $0x24] sm:$0xff]
  %v50 = vld [vmem:[%s1 + $0x2c] sm:$0xf]
  %v51 = vld [vmem:[%s1 + $0x30] sm:$0xff]
  %v52 = vld [vmem:[%s1 + $0x38] sm:$0xf]
  %v53 = vld [vmem:[%s1 + $0x3c] sm:$0xff]
  %v54 = vld [vmem:[%s1 + $0x44] sm:$0xf]
  %v55 = vld [vmem:[%s1 + $0x48] sm:$0xff]
  %v56 = vld [vmem:[%s1 + $0x50] sm:$0xf]
  %v57 = vld [vmem:[%s1 + $0x54] sm:$0xff]
  %v58 = vld [vmem:[%s1 + $0x5c] sm:$0xf]
  %v59 = vld [vmem:[%s1 + $0x60] sm:$0xff]
  %v60 = vld [vmem:[%s1 + $0x68] sm:$0xf]
  %v61 = vld [vmem:[%s1 + $0x6c] sm:$0xff]
  %v62 = vld [vmem:[%s1 + $0x74] sm:$0xf]
  %v63 = vld [vmem:[%s1 + $0x78] sm:$0xff]
  %v64 = vld [vmem:[%s1 + $0x80] sm:$0xf]
  %v65 = vld [vmem:[%s1 + $0x84] sm:$0xff]
  %v66 = vld [vmem:[%s1 + $0x8c] sm:$0xf]
  %v67 = vld [vmem:[%s1 + $0x90] sm:$0xff]
  %v68 = vld [vmem:[%s1 + $0x98] sm:$0xf]
  %v69 = vld [vmem:[%s1 + $0x9c] sm:$0xff]
  %v70 = vld [vmem:[%s1 + $0xa4] sm:$0xf]
  %v71 = vld [vmem:[%s1 + $0xa8] sm:$0xff]
  %v72 = vld [vmem:[%s1 + $0xb0] sm:$0xf]
  %v73 = vld [vmem:[%s1 + $0xb4] sm:$0xff]
  %v74 = vld [vmem:[%s1 + $0xbc] sm:$0xf]
  %v75 = vld [vmem:[%s1 + $0xc0] sm:$0xff]
  %v76 = vld [vmem:[%s1 + $0xc8] sm:$0xf]
  %v77 = vld [vmem:[%s1 + $0xcc] sm:$0xff]
  %v78 = vld [vmem:[%s1 + $0xd4] sm:$0xf]
  %v79 = vld [vmem:[%s1 + $0xd8] sm:$0xff]
  %v80 = vld [vmem:[%s1 + $0xe0] sm:$0xf]
  %v81 = vld [vmem:[%s1 + $0xe4] sm:$0xff]
  %v82 = vld [vmem:[%s1 + $0xec] sm:$0xf]
  %v83 = vld [vmem:[%s1 + $0xf0] sm:$0xff]
  %v84 = vld [vmem:[%s1 + $0xf8] sm:$0xf]
  %v85 = vld [vmem:[%s1 + $0xfc] sm:$0xff]
  %v86 = vld [vmem:[%s1 + $0x104] sm:$0xf]
  %v87 = vld [vmem:[%s1 + $0x108] sm:$0xff]
  %v88 = vld [vmem:[%s1 + $0x110] sm:$0xf]
  %v89 = vld [vmem:[%s1 + $0x114] sm:$0xff]
  %v90 = vld [vmem:[%s1 + $0x11c] sm:$0xf]
  %v91 = vld [vmem:[%s1 + $0x120] sm:$0xff]
  %v92 = vld [vmem:[%s1 + $0x128] sm:$0xf]
  %v93 = vld [vmem:[%s1 + $0x12c] sm:$0xff]
  %v94 = vld [vmem:[%s1 + $0x134] sm:$0xf]
  %v95 = vld [vmem:[%s1 + $0x138] sm:$0xff]
  %v96 = vld [vmem:[%s1 + $0x140] sm:$0xf]
  %v97 = vld [vmem:[%s1 + $0x144] sm:$0xff]
  %v98 = vld [vmem:[%s1 + $0x14c] sm:$0xf]
  %v99 = vld [vmem:[%s1 + $0x150] sm:$0xff]
  %v100 = vld [vmem:[%s1 + $0x158] sm:$0xf]
  %v101 = vld [vmem:[%s1 + $0x15c] sm:$0xff]
  %v102 = vld [vmem:[%s1 + $0x164] sm:$0xf]
  %v103 = vld [vmem:[%s1 + $0x168] sm:$0xff]
  %v104 = vld [vmem:[%s1 + $0x170] sm:$0xf]
  %v105 = vld [vmem:[%s1 + $0x174] sm:$0xff]
  %v106 = vld [vmem:[%s1 + $0x17c] sm:$0xf]
  %v107 = vld [vmem:[%s1 + $0x180] sm:$0xff]
  %v108 = vld [vmem:[%s1 + $0x188] sm:$0xf]
  %v109 = vld [vmem:[%s1 + $0x18c] sm:$0xff]
  %v110 = vld [vmem:[%s1 + $0x194] sm:$0xf]
  %v111 = vld [vmem:[%s1 + $0x198] sm:$0xff]
  %v112 = vld [vmem:[%s1 + $0x1a0] sm:$0xf]
  %v113 = vld [vmem:[%s1 + $0x1a4] sm:$0xff]
  %v114 = vld [vmem:[%s1 + $0x1ac] sm:$0xf]
  %v115 = vld [vmem:[%s1 + $0x1b0] sm:$0xff]
  %v116 = vld [vmem:[%s1 + $0x1b8] sm:$0xf]
  %v117 = vld [vmem:[%s1 + $0x1bc] sm:$0x33]
  %v118 = vld [vmem:[%s1 + $0x1c4] sm:$0x3]
  %v119 = vld [vmem:[%s2] sm:$0x7]
  %v121 = vlaneseq
  %v122 = vshrl.u32 %v121, 7
  %v123 = vsub.s32 0, %v122
  %v124 = vrot.slane %v119, %v123
  %v125 = vlaneseq
  %v126 = vshrl.u32 %v125, 7
  %v127 = vsub.s32 1, %v126
  %v128 = vrot.slane %v119, %v127
  %v129 = vlaneseq
  %v130 = vshrl.u32 %v129, 7
  %v131 = vsub.s32 2, %v130
  %v132 = vrot.slane %v119, %v131
  %v152 = vunpack.c.l.b16 %v27
  %v153 = vunpack.c.h.b16 %v27
  %v154 = vunpack.c.l.b16 %v28
  %v155 = vunpack.c.l.b16 %v29
  %v156 = vunpack.c.h.b16 %v29
  %v157 = vunpack.c.l.b16 %v30
  %v158 = vunpack.c.l.b16 %v31
  %v159 = vunpack.c.h.b16 %v31
  %v160 = vunpack.c.l.b16 %v32
  %v161 = vunpack.c.l.b16 %v33
  %v162 = vunpack.c.h.b16 %v33
  %v163 = vunpack.c.l.b16 %v34
  %v164 = vunpack.c.l.b16 %v35
  %v165 = vunpack.c.h.b16 %v35
  %v166 = vunpack.c.l.b16 %v36
  %v167 = vunpack.c.l.b16 %v37
  %v168 = vunpack.c.h.b16 %v37
  %v169 = vunpack.c.l.b16 %v38
  %v170 = vunpack.c.l.b16 %v39
  %v171 = vunpack.c.h.b16 %v39
  %v172 = vunpack.c.l.b16 %v40
  %v173 = vunpack.c.l.b16 %v41
  %v174 = vunpack.c.h.b16 %v41
  %v175 = vunpack.c.l.b16 %v42
  %v176 = vpack.c.b16 %v155, %v152
  %v177 = vpack.c.b16 %v156, %v153
  %v178 = vpack.c.b16 %v157, %v154
  %v179 = vpack.c.b16 %v161, %v158
  %v180 = vpack.c.b16 %v162, %v159
  %v181 = vpack.c.b16 %v163, %v160
  %v182 = vpack.c.b16 %v167, %v164
  %v183 = vpack.c.b16 %v168, %v165
  %v184 = vpack.c.b16 %v169, %v166
  %v185 = vpack.c.b16 %v173, %v170
  %v186 = vpack.c.b16 %v174, %v171
  %v187 = vpack.c.b16 %v175, %v172
  %v272 = vunpack.c.l.b16 %v43
  %v273 = vunpack.c.h.b16 %v43
  %v274 = vunpack.c.l.b16 %v44
  %v275 = vunpack.c.l.b16 %v45
  %v276 = vunpack.c.h.b16 %v45
  %v277 = vunpack.c.l.b16 %v46
  %v278 = vunpack.c.l.b16 %v47
  %v279 = vunpack.c.h.b16 %v47
  %v280 = vunpack.c.l.b16 %v48
  %v281 = vunpack.c.l.b16 %v49
  %v282 = vunpack.c.h.b16 %v49
  %v283 = vunpack.c.l.b16 %v50
  %v284 = vunpack.c.l.b16 %v51
  %v285 = vunpack.c.h.b16 %v51
  %v286 = vunpack.c.l.b16 %v52
  %v287 = vunpack.c.l.b16 %v53
  %v288 = vunpack.c.h.b16 %v53
  %v289 = vunpack.c.l.b16 %v54
  %v290 = vunpack.c.l.b16 %v55
  %v291 = vunpack.c.h.b16 %v55
  %v292 = vunpack.c.l.b16 %v56
  %v293 = vunpack.c.l.b16 %v57
  %v294 = vunpack.c.h.b16 %v57
  %v295 = vunpack.c.l.b16 %v58
  %v296 = vunpack.c.l.b16 %v59
  %v297 = vunpack.c.h.b16 %v59
  %v298 = vunpack.c.l.b16 %v60
  %v299 = vunpack.c.l.b16 %v61
  %v300 = vunpack.c.h.b16 %v61
  %v301 = vunpack.c.l.b16 %v62
  %v302 = vunpack.c.l.b16 %v63
  %v303 = vunpack.c.h.b16 %v63
  %v304 = vunpack.c.l.b16 %v64
  %v305 = vunpack.c.l.b16 %v65
  %v306 = vunpack.c.h.b16 %v65
  %v307 = vunpack.c.l.b16 %v66
  %v308 = vunpack.c.l.b16 %v67
  %v309 = vunpack.c.h.b16 %v67
  %v310 = vunpack.c.l.b16 %v68
  %v311 = vunpack.c.l.b16 %v69
  %v312 = vunpack.c.h.b16 %v69
  %v313 = vunpack.c.l.b16 %v70
  %v314 = vunpack.c.l.b16 %v71
  %v315 = vunpack.c.h.b16 %v71
  %v316 = vunpack.c.l.b16 %v72
  %v317 = vunpack.c.l.b16 %v73
  %v318 = vunpack.c.h.b16 %v73
  %v319 = vunpack.c.l.b16 %v74
  %v320 = vunpack.c.l.b16 %v75
  %v321 = vunpack.c.h.b16 %v75
  %v322 = vunpack.c.l.b16 %v76
  %v323 = vunpack.c.l.b16 %v77
  %v324 = vunpack.c.h.b16 %v77
  %v325 = vunpack.c.l.b16 %v78
  %v326 = vunpack.c.l.b16 %v79
  %v327 = vunpack.c.h.b16 %v79
  %v328 = vunpack.c.l.b16 %v80
  %v329 = vunpack.c.l.b16 %v81
  %v330 = vunpack.c.h.b16 %v81
  %v331 = vunpack.c.l.b16 %v82
  %v332 = vunpack.c.l.b16 %v83
  %v333 = vunpack.c.h.b16 %v83
  %v334 = vunpack.c.l.b16 %v84
  %v335 = vunpack.c.l.b16 %v85
  %v336 = vunpack.c.h.b16 %v85
  %v337 = vunpack.c.l.b16 %v86
  %v338 = vunpack.c.l.b16 %v87
  %v339 = vunpack.c.h.b16 %v87
  %v340 = vunpack.c.l.b16 %v88
  %v341 = vunpack.c.l.b16 %v89
  %v342 = vunpack.c.h.b16 %v89
  %v343 = vunpack.c.l.b16 %v90
  %v344 = vunpack.c.l.b16 %v91
  %v345 = vunpack.c.h.b16 %v91
  %v346 = vunpack.c.l.b16 %v92
  %v347 = vunpack.c.l.b16 %v93
  %v348 = vunpack.c.h.b16 %v93
  %v349 = vunpack.c.l.b16 %v94
  %v350 = vunpack.c.l.b16 %v95
  %v351 = vunpack.c.h.b16 %v95
  %v352 = vunpack.c.l.b16 %v96
  %v353 = vunpack.c.l.b16 %v97
  %v354 = vunpack.c.h.b16 %v97
  %v355 = vunpack.c.l.b16 %v98
  %v356 = vunpack.c.l.b16 %v99
  %v357 = vunpack.c.h.b16 %v99
  %v358 = vunpack.c.l.b16 %v100
  %v359 = vunpack.c.l.b16 %v101
  %v360 = vunpack.c.h.b16 %v101
  %v361 = vunpack.c.l.b16 %v102
  %v362 = vunpack.c.l.b16 %v103
  %v363 = vunpack.c.h.b16 %v103
  %v364 = vunpack.c.l.b16 %v104
  %v365 = vunpack.c.l.b16 %v105
  %v366 = vunpack.c.h.b16 %v105
  %v367 = vunpack.c.l.b16 %v106
  %v368 = vunpack.c.l.b16 %v107
  %v369 = vunpack.c.h.b16 %v107
  %v370 = vunpack.c.l.b16 %v108
  %v371 = vunpack.c.l.b16 %v109
  %v372 = vunpack.c.h.b16 %v109
  %v373 = vunpack.c.l.b16 %v110
  %v374 = vunpack.c.l.b16 %v111
  %v375 = vunpack.c.h.b16 %v111
  %v376 = vunpack.c.l.b16 %v112
  %v377 = vunpack.c.l.b16 %v113
  %v378 = vunpack.c.h.b16 %v113
  %v379 = vunpack.c.l.b16 %v114
  %v380 = vunpack.c.l.b16 %v115
  %v381 = vunpack.c.h.b16 %v115
  %v382 = vunpack.c.l.b16 %v116
  %v383 = vunpack.c.l.b16 %v117
  %v384 = vunpack.c.h.b16 %v117
  %v385 = vunpack.c.l.b16 %v118
  %v386 = vpack.c.b16 %v275, %v272
  %v387 = vpack.c.b16 %v276, %v273
  %v388 = vpack.c.b16 %v277, %v274
  %v389 = vpack.c.b16 %v281, %v278
  %v390 = vpack.c.b16 %v282, %v279
  %v391 = vpack.c.b16 %v283, %v280
  %v392 = vpack.c.b16 %v287, %v284
  %v393 = vpack.c.b16 %v288, %v285
  %v394 = vpack.c.b16 %v289, %v286
  %v395 = vpack.c.b16 %v293, %v290
  %v396 = vpack.c.b16 %v294, %v291
  %v397 = vpack.c.b16 %v295, %v292
  %v398 = vpack.c.b16 %v299, %v296
  %v399 = vpack.c.b16 %v300, %v297
  %v400 = vpack.c.b16 %v301, %v298
  %v401 = vpack.c.b16 %v305, %v302
  %v402 = vpack.c.b16 %v306, %v303
  %v403 = vpack.c.b16 %v307, %v304
  %v404 = vpack.c.b16 %v311, %v308
  %v405 = vpack.c.b16 %v312, %v309
  %v406 = vpack.c.b16 %v313, %v310
  %v407 = vpack.c.b16 %v317, %v314
  %v408 = vpack.c.b16 %v318, %v315
  %v409 = vpack.c.b16 %v319, %v316
  %v410 = vpack.c.b16 %v323, %v320
  %v411 = vpack.c.b16 %v324, %v321
  %v412 = vpack.c.b16 %v325, %v322
  %v413 = vpack.c.b16 %v329, %v326
  %v414 = vpack.c.b16 %v330, %v327
  %v415 = vpack.c.b16 %v331, %v328
  %v416 = vpack.c.b16 %v335, %v332
  %v417 = vpack.c.b16 %v336, %v333
  %v418 = vpack.c.b16 %v337, %v334
  %v419 = vpack.c.b16 %v341, %v338
  %v420 = vpack.c.b16 %v342, %v339
  %v421 = vpack.c.b16 %v343, %v340
  %v422 = vpack.c.b16 %v347, %v344
  %v423 = vpack.c.b16 %v348, %v345
  %v424 = vpack.c.b16 %v349, %v346
  %v425 = vpack.c.b16 %v353, %v350
  %v426 = vpack.c.b16 %v354, %v351
  %v427 = vpack.c.b16 %v355, %v352
  %v428 = vpack.c.b16 %v359, %v356
  %v429 = vpack.c.b16 %v360, %v357
  %v430 = vpack.c.b16 %v361, %v358
  %v431 = vpack.c.b16 %v365, %v362
  %v432 = vpack.c.b16 %v366, %v363
  %v433 = vpack.c.b16 %v367, %v364
  %v434 = vpack.c.b16 %v371, %v368
  %v435 = vpack.c.b16 %v372, %v369
  %v436 = vpack.c.b16 %v373, %v370
  %v437 = vpack.c.b16 %v377, %v374
  %v438 = vpack.c.b16 %v378, %v375
  %v439 = vpack.c.b16 %v379, %v376
  %v440 = vpack.c.b16 %v383, %v380
  %v441 = vpack.c.b16 %v384, %v381
  %v442 = vpack.c.b16 %v385, %v382
  %vm497 = vcmask 359424
  %v499 = vsel %vm497, %v178, 0
  %v502 = vsel %vm497, %v181, 0
  %v505 = vsel %vm497, %v184, 0
  %v508 = vsel %vm497, %v187, 0
  %vm510 = vcmask 1045504
  %v512 = vsel %vm510, %v440, 0
  %v515 = vsel %vm510, %v441, 0
  %v518 = vsel %vm510, %v442, 0
  %520 = vmatprep.subr.bf16.mxu0 %v387
  %521 = vmatpush1.bf16.msra.mxu0 %v386
  %522 = vmatprep.subr.bf16.mxu0 %v390
  %523 = vmatpush1.bf16.msra.mxu0 %v389
  %524 = vmatprep.subr.bf16.mxu0 %v393
  %525 = vmatpush1.bf16.msra.mxu0 %v392
  %526 = vmatprep.subr.bf16.mxu0 %v396
  %527 = vmatpush1.bf16.msra.mxu0 %v395
  %528 = vmatprep.subr.bf16.mxu0 %v399
  %529 = vmatpush1.bf16.msra.mxu0 %v398
  %530 = vmatprep.subr.bf16.mxu0 %v402
  %531 = vmatpush1.bf16.msra.mxu0 %v401
  %532 = vmatprep.subr.bf16.mxu0 %v405
  %533 = vmatpush1.bf16.msra.mxu0 %v404
  %534 = vmatprep.subr.bf16.mxu0 %v408
  %535 = vmatpush1.bf16.msra.mxu0 %v407
  %536 = vmatprep.subr.bf16.mxu0 %v411
  %537 = vmatpush1.bf16.msra.mxu0 %v410
  %538 = vmatprep.subr.bf16.mxu0 %v414
  %539 = vmatpush1.bf16.msra.mxu0 %v413
  %540 = vmatprep.subr.bf16.mxu0 %v417
  %541 = vmatpush1.bf16.msra.mxu0 %v416
  %542 = vmatprep.subr.bf16.mxu0 %v420
  %543 = vmatpush1.bf16.msra.mxu0 %v419
  %544 = vmatprep.subr.bf16.mxu0 %v423
  %545 = vmatpush1.bf16.msra.mxu0 %v422
  %546 = vmatprep.subr.bf16.mxu0 %v426
  %547 = vmatpush1.bf16.msra.mxu0 %v425
  %548 = vmatprep.subr.bf16.mxu0 %v429
  %549 = vmatpush1.bf16.msra.mxu0 %v428
  %550 = vmatprep.subr.bf16.mxu0 %v432
  %551 = vmatpush1.bf16.msra.mxu0 %v431
  %552 = vmatprep.mubr.bf16.mxu0 %v177
  %553 = vmatmul.mubr.bf16.gmra.mrb[0].mxu0 %v176
  %v554 = vpop.f32.mrb[0].mxu0
  %v555 = vadd.f32 %v124, %v554
  %v556 = vpop.f32.mrb[0].mxu0
  %v557 = vadd.f32 %v128, %v556
  %v558 = vpop.f32.mrb[0].mxu0
  %v559 = vadd.f32 %v124, %v558
  %v560 = vpop.f32.mrb[0].mxu0
  %v561 = vadd.f32 %v128, %v560
  %562 = vmatprep.mubr.bf16.mxu0 %v180
  %563 = vmatmul.mubr.bf16.gmra.mrb[0].mxu0 %v179
  %v564 = vpop.f32.mrb[0].mxu0
  %v565 = vadd.f32 %v124, %v564
  %v566 = vpop.f32.mrb[0].mxu0
  %v567 = vadd.f32 %v128, %v566
  %v568 = vpop.f32.mrb[0].mxu0
  %v569 = vadd.f32 %v124, %v568
  %v570 = vpop.f32.mrb[0].mxu0
  %v571 = vadd.f32 %v128, %v570
  %572 = vmatprep.mubr.bf16.mxu0 %v183
  %573 = vmatmul.mubr.bf16.gmra.mrb[0].mxu0 %v182
  %v574 = vpop.f32.mrb[0].mxu0
  %v575 = vadd.f32 %v124, %v574
  %v576 = vpop.f32.mrb[0].mxu0
  %v577 = vadd.f32 %v128, %v576
  %v578 = vpop.f32.mrb[0].mxu0
  %v579 = vadd.f32 %v124, %v578
  %v580 = vpop.f32.mrb[0].mxu0
  %v581 = vadd.f32 %v128, %v580
  %582 = vmatprep.mubr.bf16.mxu0 %v186
  %583 = vmatmul.mubr.bf16.gmra.mrb[0].mxu0 %v185
  %v584 = vpop.f32.mrb[0].mxu0
  %v585 = vadd.f32 %v124, %v584
  %v586 = vpop.f32.mrb[0].mxu0
  %v587 = vadd.f32 %v128, %v586
  %v588 = vpop.f32.mrb[0].mxu0
  %v589 = vadd.f32 %v124, %v588
  %v590 = vpop.f32.mrb[0].mxu0
  %v591 = vadd.f32 %v128, %v590
  %592 = vdwg.mxu0
  %593 = vmatprep.subr.bf16.mxu0 %v435
  %594 = vmatpush1.bf16.msra.mxu0 %v434
  %595 = vmatprep.subr.bf16.mxu0 %v438
  %596 = vmatpush1.bf16.msra.mxu0 %v437
  %597 = vmatprep.subr.bf16.mxu0 %v515
  %598 = vmatpush1.bf16.msra.mxu0 %v512
  %599 = vmatprep.subr.bf16.mxu0 0
  %600 = vmatpush1.bf16.msra.mxu0 0
  %601 = vmatprep.subr.bf16.mxu0 0
  %602 = vmatpush1.bf16.msra.mxu0 0
  %603 = vmatprep.subr.bf16.mxu0 0
  %604 = vmatpush1.bf16.msra.mxu0 0
  %605 = vmatprep.subr.bf16.mxu0 0
  %606 = vmatpush1.bf16.msra.mxu0 0
  %607 = vmatprep.subr.bf16.mxu0 0
  %608 = vmatpush1.bf16.msra.mxu0 0
  %609 = vmatprep.subr.bf16.mxu0 0
  %610 = vmatpush1.bf16.msra.mxu0 0
  %611 = vmatprep.subr.bf16.mxu0 0
  %612 = vmatpush1.bf16.msra.mxu0 0
  %613 = vmatprep.subr.bf16.mxu0 0
  %614 = vmatpush1.bf16.msra.mxu0 0
  %615 = vmatprep.subr.bf16.mxu0 0
  %616 = vmatpush1.bf16.msra.mxu0 0
  %617 = vmatprep.subr.bf16.mxu0 0
  %618 = vmatpush1.bf16.msra.mxu0 0
  %619 = vmatprep.subr.bf16.mxu0 0
  %620 = vmatpush1.bf16.msra.mxu0 0
  %621 = vmatprep.subr.bf16.mxu0 0
  %622 = vmatpush1.bf16.msra.mxu0 0
  %623 = vmatprep.subr.bf16.mxu0 0
  %624 = vmatpush1.bf16.msra.mxu0 0
  %625 = vmatprep.mubr.bf16.mxu0 0
  %626 = vmatmul.mubr.bf16.gmra.mrb[0].mxu0 %v499
  %v627 = vpop.f32.mrb[0].mxu0
  %v628 = vadd.f32 %v555, %v627
  %v629 = vpop.f32.mrb[0].mxu0
  %v630 = vadd.f32 %v557, %v629
  %v631 = vpop.f32.mrb[0].mxu0
  %v632 = vadd.f32 %v559, %v631
  %v633 = vpop.f32.mrb[0].mxu0
  %v634 = vadd.f32 %v561, %v633
  %635 = vmatprep.mubr.bf16.mxu0 0
  %636 = vmatmul.mubr.bf16.gmra.mrb[0].mxu0 %v502
  %v637 = vpop.f32.mrb[0].mxu0
  %v638 = vadd.f32 %v565, %v637
  %v639 = vpop.f32.mrb[0].mxu0
  %v640 = vadd.f32 %v567, %v639
  %v641 = vpop.f32.mrb[0].mxu0
  %v642 = vadd.f32 %v569, %v641
  %v643 = vpop.f32.mrb[0].mxu0
  %v644 = vadd.f32 %v571, %v643
  %645 = vmatprep.mubr.bf16.mxu0 0
  %646 = vmatmul.mubr.bf16.gmra.mrb[0].mxu0 %v505
  %v647 = vpop.f32.mrb[0].mxu0
  %v648 = vadd.f32 %v575, %v647
  %v649 = vpop.f32.mrb[0].mxu0
  %v650 = vadd.f32 %v577, %v649
  %v651 = vpop.f32.mrb[0].mxu0
  %v652 = vadd.f32 %v579, %v651
  %v653 = vpop.f32.mrb[0].mxu0
  %v654 = vadd.f32 %v581, %v653
  %655 = vmatprep.mubr.bf16.mxu0 0
  %656 = vmatmul.mubr.bf16.gmra.mrb[0].mxu0 %v508
  %v657 = vpop.f32.mrb[0].mxu0
  %v658 = vadd.f32 %v585, %v657
  %v659 = vpop.f32.mrb[0].mxu0
  %v660 = vadd.f32 %v587, %v659
  %v661 = vpop.f32.mrb[0].mxu0
  %v662 = vadd.f32 %v589, %v661
  %v663 = vpop.f32.mrb[0].mxu0
  %v664 = vadd.f32 %v591, %v663
  %665 = vdwg.mxu0
  %666 = vmatprep.subr.bf16.mxu0 0
  %667 = vmatpush1.bf16.msra.mxu0 %v388
  %668 = vmatprep.subr.bf16.mxu0 0
  %669 = vmatpush1.bf16.msra.mxu0 %v391
  %670 = vmatprep.subr.bf16.mxu0 0
  %671 = vmatpush1.bf16.msra.mxu0 %v394
  %672 = vmatprep.subr.bf16.mxu0 0
  %673 = vmatpush1.bf16.msra.mxu0 %v397
  %674 = vmatprep.subr.bf16.mxu0 0
  %675 = vmatpush1.bf16.msra.mxu0 %v400
  %676 = vmatprep.subr.bf16.mxu0 0
  %677 = vmatpush1.bf16.msra.mxu0 %v403
  %678 = vmatprep.subr.bf16.mxu0 0
  %679 = vmatpush1.bf16.msra.mxu0 %v406
  %680 = vmatprep.subr.bf16.mxu0 0
  %681 = vmatpush1.bf16.msra.mxu0 %v409
  %682 = vmatprep.subr.bf16.mxu0 0
  %683 = vmatpush1.bf16.msra.mxu0 %v412
  %684 = vmatprep.subr.bf16.mxu0 0
  %685 = vmatpush1.bf16.msra.mxu0 %v415
  %686 = vmatprep.subr.bf16.mxu0 0
  %687 = vmatpush1.bf16.msra.mxu0 %v418
  %688 = vmatprep.subr.bf16.mxu0 0
  %689 = vmatpush1.bf16.msra.mxu0 %v421
  %690 = vmatprep.subr.bf16.mxu0 0
  %691 = vmatpush1.bf16.msra.mxu0 %v424
  %692 = vmatprep.subr.bf16.mxu0 0
  %693 = vmatpush1.bf16.msra.mxu0 %v427
  %694 = vmatprep.subr.bf16.mxu0 0
  %695 = vmatpush1.bf16.msra.mxu0 %v430
  %696 = vmatprep.subr.bf16.mxu0 0
  %697 = vmatpush1.bf16.msra.mxu0 %v433
  %698 = vmatprep.mubr.bf16.mxu0 %v177
  %699 = vmatmul.mubr.bf16.gmra.mrb[0].mxu0 %v176
  %v700 = vpop.f32.mrb[0].mxu0
  %v701 = vadd.f32 %v132, %v700
  %v702 = vpop.f32.mrb[0].mxu0
  %v703 = vpop.f32.mrb[0].mxu0
  %v704 = vadd.f32 %v132, %v703
  %v705 = vpop.f32.mrb[0].mxu0
  %706 = vmatprep.mubr.bf16.mxu0 %v180
  %707 = vmatmul.mubr.bf16.gmra.mrb[0].mxu0 %v179
  %v708 = vpop.f32.mrb[0].mxu0
  %v709 = vadd.f32 %v132, %v708
  %v710 = vpop.f32.mrb[0].mxu0
  %v711 = vpop.f32.mrb[0].mxu0
  %v712 = vadd.f32 %v132, %v711
  %v713 = vpop.f32.mrb[0].mxu0
  %714 = vmatprep.mubr.bf16.mxu0 %v183
  %715 = vmatmul.mubr.bf16.gmra.mrb[0].mxu0 %v182
  %v716 = vpop.f32.mrb[0].mxu0
  %v717 = vadd.f32 %v132, %v716
  %v718 = vpop.f32.mrb[0].mxu0
  %v719 = vpop.f32.mrb[0].mxu0
  %v720 = vadd.f32 %v132, %v719
  %v721 = vpop.f32.mrb[0].mxu0
  %722 = vmatprep.mubr.bf16.mxu0 %v186
  %723 = vmatmul.mubr.bf16.gmra.mrb[0].mxu0 %v185
  %v724 = vpop.f32.mrb[0].mxu0
  %v725 = vadd.f32 %v132, %v724
  %v726 = vpop.f32.mrb[0].mxu0
  %v727 = vpop.f32.mrb[0].mxu0
  %v728 = vadd.f32 %v132, %v727
  %v729 = vpop.f32.mrb[0].mxu0
  %730 = vdwg.mxu0
  %731 = vmatprep.subr.bf16.mxu0 0
  %732 = vmatpush1.bf16.msra.mxu0 %v436
  %733 = vmatprep.subr.bf16.mxu0 0
  %734 = vmatpush1.bf16.msra.mxu0 %v439
  %735 = vmatprep.subr.bf16.mxu0 0
  %736 = vmatpush1.bf16.msra.mxu0 %v518
  %737 = vmatprep.subr.bf16.mxu0 0
  %738 = vmatpush1.bf16.msra.mxu0 0
  %739 = vmatprep.subr.bf16.mxu0 0
  %740 = vmatpush1.bf16.msra.mxu0 0
  %741 = vmatprep.subr.bf16.mxu0 0
  %742 = vmatpush1.bf16.msra.mxu0 0
  %743 = vmatprep.subr.bf16.mxu0 0
  %744 = vmatpush1.bf16.msra.mxu0 0
  %745 = vmatprep.subr.bf16.mxu0 0
  %746 = vmatpush1.bf16.msra.mxu0 0
  %747 = vmatprep.subr.bf16.mxu0 0
  %748 = vmatpush1.bf16.msra.mxu0 0
  %749 = vmatprep.subr.bf16.mxu0 0
  %750 = vmatpush1.bf16.msra.mxu0 0
  %751 = vmatprep.subr.bf16.mxu0 0
  %752 = vmatpush1.bf16.msra.mxu0 0
  %753 = vmatprep.subr.bf16.mxu0 0
  %754 = vmatpush1.bf16.msra.mxu0 0
  %755 = vmatprep.subr.bf16.mxu0 0
  %756 = vmatpush1.bf16.msra.mxu0 0
  %757 = vmatprep.subr.bf16.mxu0 0
  %758 = vmatpush1.bf16.msra.mxu0 0
  %759 = vmatprep.subr.bf16.mxu0 0
  %760 = vmatpush1.bf16.msra.mxu0 0
  %761 = vmatprep.subr.bf16.mxu0 0
  %762 = vmatpush1.bf16.msra.mxu0 0
  %763 = vmatprep.mubr.bf16.mxu0 0
  %764 = vmatmul.mubr.bf16.gmra.mrb[0].mxu0 %v499
  %v765 = vpop.f32.mrb[0].mxu0
  %v766 = vadd.f32 %v701, %v765
  %v767 = vpop.f32.mrb[0].mxu0
  %v768 = vpop.f32.mrb[0].mxu0
  %v769 = vadd.f32 %v704, %v768
  %v770 = vpop.f32.mrb[0].mxu0
  %771 = vmatprep.mubr.bf16.mxu0 0
  %772 = vmatmul.mubr.bf16.gmra.mrb[0].mxu0 %v502
  %v773 = vpop.f32.mrb[0].mxu0
  %v774 = vadd.f32 %v709, %v773
  %v775 = vpop.f32.mrb[0].mxu0
  %v776 = vpop.f32.mrb[0].mxu0
  %v777 = vadd.f32 %v712, %v776
  %v778 = vpop.f32.mrb[0].mxu0
  %779 = vmatprep.mubr.bf16.mxu0 0
  %780 = vmatmul.mubr.bf16.gmra.mrb[0].mxu0 %v505
  %v781 = vpop.f32.mrb[0].mxu0
  %v782 = vadd.f32 %v717, %v781
  %v783 = vpop.f32.mrb[0].mxu0
  %v784 = vpop.f32.mrb[0].mxu0
  %v785 = vadd.f32 %v720, %v784
  %v786 = vpop.f32.mrb[0].mxu0
  %787 = vmatprep.mubr.bf16.mxu0 0
  %788 = vmatmul.mubr.bf16.gmra.mrb[0].mxu0 %v508
  %v789 = vpop.f32.mrb[0].mxu0
  %v790 = vadd.f32 %v725, %v789
  %v791 = vpop.f32.mrb[0].mxu0
  %v792 = vpop.f32.mrb[0].mxu0
  %v793 = vadd.f32 %v728, %v792
  %v794 = vpop.f32.mrb[0].mxu0
  %795 = vdwg.mxu0
  %796 = vst [vmem:[#allocation2] sm:$0xff] %v628
  %797 = vst [vmem:[#allocation2 + $0x8] sm:$0xff] %v630
  %798 = vst [vmem:[#allocation2 + $0x10] sm:$0xff] %v766
  %799 = vst [vmem:[#allocation2 + $0x18] sm:$0xff] %v632
  %800 = vst [vmem:[#allocation2 + $0x20] sm:$0xff] %v634
  %801 = vst [vmem:[#allocation2 + $0x28] sm:$0xff] %v769
  %802 = vst [vmem:[#allocation2 + $0x30] sm:$0xff] %v638
  %803 = vst [vmem:[#allocation2 + $0x38] sm:$0xff] %v640
  %804 = vst [vmem:[#allocation2 + $0x40] sm:$0xff] %v774
  %805 = vst [vmem:[#allocation2 + $0x48] sm:$0xff] %v642
  %806 = vst [vmem:[#allocation2 + $0x50] sm:$0xff] %v644
  %807 = vst [vmem:[#allocation2 + $0x58] sm:$0xff] %v777
  %808 = vst [vmem:[#allocation2 + $0x60] sm:$0xff] %v648
  %809 = vst [vmem:[#allocation2 + $0x68] sm:$0xff] %v650
  %810 = vst [vmem:[#allocation2 + $0x70] sm:$0xff] %v782
  %811 = vst [vmem:[#allocation2 + $0x78] sm:$0xff] %v652
  %812 = vst [vmem:[#allocation2 + $0x80] sm:$0xff] %v654
  %813 = vst [vmem:[#allocation2 + $0x88] sm:$0xff] %v785
  %814 = vst [vmem:[#allocation2 + $0x90] sm:$0xff] %v658
  %815 = vst [vmem:[#allocation2 + $0x98] sm:$0xff] %v660
  %816 = vst [vmem:[#allocation2 + $0xa0] sm:$0xff] %v790
  %817 = vst [vmem:[#allocation2 + $0xa8] sm:$0xff] %v662
  %818 = vst [vmem:[#allocation2 + $0xb0] sm:$0xff] %v664
  %819 = vst [vmem:[#allocation2 + $0xb8] sm:$0xff] %v793
  %v820 = vld [vmem:[%s3] sm:$0xff]
  %v821 = vld [vmem:[%s3 + $0x8] sm:$0xf]
  %v822 = vld [vmem:[%s3 + $0xc] sm:$0xff]
  %v823 = vld [vmem:[%s3 + $0x14] sm:$0xf]
  %v824 = vld [vmem:[%s3 + $0x18] sm:$0xff]
  %v825 = vld [vmem:[%s3 + $0x20] sm:$0xf]
  %v826 = vld [vmem:[%s3 + $0x24] sm:$0xff]
  %v827 = vld [vmem:[%s3 + $0x2c] sm:$0xf]
  %v828 = vld [vmem:[%s3 + $0x30] sm:$0xff]
  %v829 = vld [vmem:[%s3 + $0x38] sm:$0xf]
  %v830 = vld [vmem:[%s3 + $0x3c] sm:$0xff]
  %v831 = vld [vmem:[%s3 + $0x44] sm:$0xf]
  %v832 = vld [vmem:[%s3 + $0x48] sm:$0xff]
  %v833 = vld [vmem:[%s3 + $0x50] sm:$0xf]
  %v834 = vld [vmem:[%s3 + $0x54] sm:$0xff]
  %v835 = vld [vmem:[%s3 + $0x5c] sm:$0xf]
  %v836 = vld [vmem:[%s3 + $0x60] sm:$0xff]
  %v837 = vld [vmem:[%s3 + $0x68] sm:$0xf]
  %v838 = vld [vmem:[%s3 + $0x6c] sm:$0xff]
  %v839 = vld [vmem:[%s3 + $0x74] sm:$0xf]
  %v840 = vld [vmem:[%s3 + $0x78] sm:$0xff]
  %v841 = vld [vmem:[%s3 + $0x80] sm:$0xf]
  %v842 = vld [vmem:[%s3 + $0x84] sm:$0xff]
  %v843 = vld [vmem:[%s3 + $0x8c] sm:$0xf]
  %v844 = vld [vmem:[%s3 + $0x90] sm:$0xff]
  %v845 = vld [vmem:[%s3 + $0x98] sm:$0xf]
  %v846 = vld [vmem:[%s3 + $0x9c] sm:$0xff]
  %v847 = vld [vmem:[%s3 + $0xa4] sm:$0xf]
  %v848 = vld [vmem:[%s3 + $0xa8] sm:$0xff]
  %v849 = vld [vmem:[%s3 + $0xb0] sm:$0xf]
  %v850 = vld [vmem:[%s3 + $0xb4] sm:$0xff]
  %v851 = vld [vmem:[%s3 + $0xbc] sm:$0xf]
  %v852 = vld [vmem:[%s4] sm:$0x1]
  %v853 = vlaneseq
  %v854 = vand.u32 %v853, 127
  %v855 = vadd.s32 %v854, 128
  %v856 = vadd.s32 %v854, 256
  %vm857 = vcmp.lt.s32.totalorder %v854, 0
  %v858 = vsub.s32 0, %v854
  %v859 = vsel %vm857, %v858, %v854
  %v860 = vshrl.u32 %v859, 7
  %v861 = vand.u32 %v859, 127
  %v862 = vsub.s32 0, %v861
  %v863 = vsel %vm857, %v862, %v861
  %vm864 = vcmp.lt.s32.totalorder %v855, 0
  %v865 = vsub.s32 0, %v855
  %v866 = vsel %vm864, %v865, %v855
  %v867 = vshrl.u32 %v866, 7
  %v868 = vand.u32 %v866, 127
  %v869 = vsub.s32 0, %v868
  %v870 = vsel %vm864, %v869, %v868
  %vm871 = vcmp.lt.s32.totalorder %v856, 0
  %v872 = vsub.s32 0, %v856
  %v873 = vsel %vm871, %v872, %v856
  %v874 = vshrl.u32 %v873, 7
  %v875 = vand.u32 %v873, 127
  %v876 = vsub.s32 0, %v875
  %v877 = vsel %vm871, %v876, %v875
  %vm878 = vcmp.ne.s32.totalorder %v863, 0
  %vm879 = vcmp.ne.s32.totalorder %v870, 0
  %vm880 = vcmp.ne.s32.totalorder %v877, 0
  %vm881 = vcmp.lt.s32.totalorder %v863, 0
  %vm882 = vcmp.lt.s32.totalorder %v870, 0
  %vm883 = vcmp.lt.s32.totalorder %v877, 0
  %vm884 = vmand %vm881, %vm878
  %vm885 = vmand %vm882, %vm879
  %vm886 = vmand %vm883, %vm880
  %v887 = vadd.s32 %v863, 128
  %v888 = vadd.s32 %v870, 128
  %v889 = vadd.s32 %v877, 128
  %v890 = vsel %vm884, %v887, %v863
  %v891 = vsel %vm885, %v888, %v870
  %v892 = vsel %vm886, %v889, %v877
  %vm893 = vcmp.lt.s32.totalorder %v890, 32
  %vm894 = vcmp.lt.s32.totalorder %v891, 32
  %vm895 = vcmp.lt.s32.totalorder %v892, 32
  %v896 = vld [vmem:[#allocation2] sm:$0xff]
  %v897 = vld [vmem:[#allocation2 + $0x8] sm:$0xff]
  %v898 = vld [vmem:[#allocation2 + $0x10] sm:$0xff]
  %v899 = vld [vmem:[#allocation2 + $0xa8] sm:$0xff]
  %v900 = vld [vmem:[#allocation2 + $0xb0] sm:$0xff]
  %v901 = vld [vmem:[#allocation2 + $0xb8] sm:$0xff]
  %v902 = vsel %vm893, %v896, %v899
  %v903 = vsel %vm894, %v897, %v900
  %v904 = vsel %vm895, %v898, %v901
  %v937 = vunpack.c.l.b16 %v820
  %v938 = vunpack.c.h.b16 %v820
  %v939 = vunpack.c.l.b16 %v821
  %v940 = vunpack.c.l.b16 %v822
  %v941 = vunpack.c.h.b16 %v822
  %v942 = vunpack.c.l.b16 %v823
  %v943 = vunpack.c.l.b16 %v824
  %v944 = vunpack.c.h.b16 %v824
  %v945 = vunpack.c.l.b16 %v825
  %v946 = vunpack.c.l.b16 %v826
  %v947 = vunpack.c.h.b16 %v826
  %v948 = vunpack.c.l.b16 %v827
  %v949 = vunpack.c.l.b16 %v828
  %v950 = vunpack.c.h.b16 %v828
  %v951 = vunpack.c.l.b16 %v829
  %v952 = vunpack.c.l.b16 %v830
  %v953 = vunpack.c.h.b16 %v830
  %v954 = vunpack.c.l.b16 %v831
  %v955 = vunpack.c.l.b16 %v832
  %v956 = vunpack.c.h.b16 %v832
  %v957 = vunpack.c.l.b16 %v833
  %v958 = vunpack.c.l.b16 %v834
  %v959 = vunpack.c.h.b16 %v834
  %v960 = vunpack.c.l.b16 %v835
  %v961 = vunpack.c.l.b16 %v836
  %v962 = vunpack.c.h.b16 %v836
  %v963 = vunpack.c.l.b16 %v837
  %v964 = vunpack.c.l.b16 %v838
  %v965 = vunpack.c.h.b16 %v838
  %v966 = vunpack.c.l.b16 %v839
  %v967 = vunpack.c.l.b16 %v840
  %v968 = vunpack.c.h.b16 %v840
  %v969 = vunpack.c.l.b16 %v841
  %v970 = vunpack.c.l.b16 %v842
  %v971 = vunpack.c.h.b16 %v842
  %v972 = vunpack.c.l.b16 %v843
  %v973 = vunpack.c.l.b16 %v844
  %v974 = vunpack.c.h.b16 %v844
  %v975 = vunpack.c.l.b16 %v845
  %v976 = vunpack.c.l.b16 %v846
  %v977 = vunpack.c.h.b16 %v846
  %v978 = vunpack.c.l.b16 %v847
  %v979 = vunpack.c.l.b16 %v848
  %v980 = vunpack.c.h.b16 %v848
  %v981 = vunpack.c.l.b16 %v849
  %v982 = vunpack.c.l.b16 %v850
  %v983 = vunpack.c.h.b16 %v850
  %v984 = vunpack.c.l.b16 %v851
  %v985 = vpack.c.b16 %v940, %v937
  %v986 = vpack.c.b16 %v941, %v938
  %v987 = vpack.c.b16 %v942, %v939
  %v988 = vpack.c.b16 %v946, %v943
  %v989 = vpack.c.b16 %v947, %v944
  %v990 = vpack.c.b16 %v948, %v945
  %v991 = vpack.c.b16 %v952, %v949
  %v992 = vpack.c.b16 %v953, %v950
  %v993 = vpack.c.b16 %v954, %v951
  %v994 = vpack.c.b16 %v958, %v955
  %v995 = vpack.c.b16 %v959, %v956
  %v996 = vpack.c.b16 %v960, %v957
  %v997 = vpack.c.b16 %v964, %v961
  %v998 = vpack.c.b16 %v965, %v962
  %v999 = vpack.c.b16 %v966, %v963
  %v1000 = vpack.c.b16 %v970, %v967
  %v1001 = vpack.c.b16 %v971, %v968
  %v1002 = vpack.c.b16 %v972, %v969
  %v1003 = vpack.c.b16 %v976, %v973
  %v1004 = vpack.c.b16 %v977, %v974
  %v1005 = vpack.c.b16 %v978, %v975
  %v1006 = vpack.c.b16 %v982, %v979
  %v1007 = vpack.c.b16 %v983, %v980
  %v1008 = vpack.c.b16 %v984, %v981
  %1033 = vmatprep.subr.bf16.mxu0 %v986
  %1034 = vmatpush1.bf16.msra.mxu0 %v985
  %1035 = vmatprep.subr.bf16.mxu0 %v989
  %1036 = vmatpush1.bf16.msra.mxu0 %v988
  %1037 = vmatprep.subr.bf16.mxu0 %v992
  %1038 = vmatpush1.bf16.msra.mxu0 %v991
  %1039 = vmatprep.subr.bf16.mxu0 %v995
  %1040 = vmatpush1.bf16.msra.mxu0 %v994
  %1041 = vmatprep.subr.bf16.mxu0 %v998
  %1042 = vmatpush1.bf16.msra.mxu0 %v997
  %1043 = vmatprep.subr.bf16.mxu0 %v1001
  %1044 = vmatpush1.bf16.msra.mxu0 %v1000
  %1045 = vmatprep.subr.bf16.mxu0 %v1004
  %1046 = vmatpush1.bf16.msra.mxu0 %v1003
  %1047 = vmatprep.subr.bf16.mxu0 %v1007
  %1048 = vmatpush1.bf16.msra.mxu0 %v1006
  %1049 = vmatprep.subr.bf16.mxu0 0
  %1050 = vmatpush1.bf16.msra.mxu0 0
  %1051 = vmatprep.subr.bf16.mxu0 0
  %1052 = vmatpush1.bf16.msra.mxu0 0
  %1053 = vmatprep.subr.bf16.mxu0 0
  %1054 = vmatpush1.bf16.msra.mxu0 0
  %1055 = vmatprep.subr.bf16.mxu0 0
  %1056 = vmatpush1.bf16.msra.mxu0 0
  %1057 = vmatprep.subr.bf16.mxu0 0
  %1058 = vmatpush1.bf16.msra.mxu0 0
  %1059 = vmatprep.subr.bf16.mxu0 0
  %1060 = vmatpush1.bf16.msra.mxu0 0
  %1061 = vmatprep.subr.bf16.mxu0 0
  %1062 = vmatpush1.bf16.msra.mxu0 0
  %1063 = vmatprep.subr.bf16.mxu0 0
  %1064 = vmatpush1.bf16.msra.mxu0 0
  %1065 = vmatprep.mubr.bf16.mxu0 0
  %1066 = vmatmul.mubr.bf16.gmra.mrb[0].mxu0 0
  %v1067 = vpop.f32.mrb[0].mxu0
  %v1068 = vadd.f32 0.0, %v1067
  %v1069 = vpop.f32.mrb[0].mxu0
  %v1070 = vadd.f32 0.0, %v1069
  %v1071 = vpop.f32.mrb[0].mxu0
  %v1072 = vpop.f32.mrb[0].mxu0
  %1073 = vdwg.mxu0
  %1074 = vmatprep.subr.bf16.mxu0 0
  %1075 = vmatpush1.bf16.msra.mxu0 %v987
  %1076 = vmatprep.subr.bf16.mxu0 0
  %1077 = vmatpush1.bf16.msra.mxu0 %v990
  %1078 = vmatprep.subr.bf16.mxu0 0
  %1079 = vmatpush1.bf16.msra.mxu0 %v993
  %1080 = vmatprep.subr.bf16.mxu0 0
  %1081 = vmatpush1.bf16.msra.mxu0 %v996
  %1082 = vmatprep.subr.bf16.mxu0 0
  %1083 = vmatpush1.bf16.msra.mxu0 %v999
  %1084 = vmatprep.subr.bf16.mxu0 0
  %1085 = vmatpush1.bf16.msra.mxu0 %v1002
  %1086 = vmatprep.subr.bf16.mxu0 0
  %1087 = vmatpush1.bf16.msra.mxu0 %v1005
  %1088 = vmatprep.subr.bf16.mxu0 0
  %1089 = vmatpush1.bf16.msra.mxu0 %v1008
  %1090 = vmatprep.subr.bf16.mxu0 0
  %1091 = vmatpush1.bf16.msra.mxu0 0
  %1092 = vmatprep.subr.bf16.mxu0 0
  %1093 = vmatpush1.bf16.msra.mxu0 0
  %1094 = vmatprep.subr.bf16.mxu0 0
  %1095 = vmatpush1.bf16.msra.mxu0 0
  %1096 = vmatprep.subr.bf16.mxu0 0
  %1097 = vmatpush1.bf16.msra.mxu0 0
  %1098 = vmatprep.subr.bf16.mxu0 0
  %1099 = vmatpush1.bf16.msra.mxu0 0
  %1100 = vmatprep.subr.bf16.mxu0 0
  %1101 = vmatpush1.bf16.msra.mxu0 0
  %1102 = vmatprep.subr.bf16.mxu0 0
  %1103 = vmatpush1.bf16.msra.mxu0 0
  %1104 = vmatprep.subr.bf16.mxu0 0
  %1105 = vmatpush1.bf16.msra.mxu0 0
  %1106 = vmatprep.mubr.bf16.mxu0 0
  %1107 = vmatmul.mubr.bf16.gmra.mrb[0].mxu0 0
  %v1108 = vpop.f32.mrb[0].mxu0
  %v1109 = vadd.f32 0.0, %v1108
  %v1110 = vpop.f32.mrb[0].mxu0
  %v1111 = vpop.f32.mrb[0].mxu0
  %v1112 = vpop.f32.mrb[0].mxu0
  %1113 = vdwg.mxu0
  %v1114 = vadd.f32 %v902, %v1068
  %v1115 = vxor.u32 %v1114, 2147483648
  %v1116 = vmul.f32 %v1115, 1.442695
  %v1117 = vpow.pop %v1116
  %v1118 = vadd.f32 %v1117, 1.0
  %v1119 = vrcp.pop %v1118
  %v1120 = vmul.f32 1.0, %v1119
  %v1121 = vadd.f32 %v903, %v1070
  %v1122 = vxor.u32 %v1121, 2147483648
  %v1123 = vmul.f32 %v1122, 1.442695
  %v1124 = vpow.pop %v1123
  %v1125 = vadd.f32 %v1124, 1.0
  %v1126 = vrcp.pop %v1125
  %v1127 = vmul.f32 1.0, %v1126
  %v1129 = vlaneseq
  %v1130 = vshrl.u32 %v1129, 7
  %v1131 = vsub.s32 0, %v1130
  %v1132 = vrot.slane %v852, %v1131
  %v1134 = vadd.f32 %v1109, %v1132
  %v1135 = vmul.f32 %v1120, %v1134
  %v1136 = vadd.f32 %v904, %v1135
  %v1137 = vtanh.pop %v1136
  %v1138 = vsub.f32 1.0, %v1127
  %v1139 = vmul.f32 %v1138, %v1137
  %v1140 = vmul.f32 %v1127, 0.0
  %v1141 = vadd.f32 %v1139, %v1140
  %v1142 = vld [vmem:[#allocation2 + $0x18] sm:$0xff]
  %v1143 = vld [vmem:[#allocation2 + $0x20] sm:$0xff]
  %v1144 = vld [vmem:[#allocation2 + $0x28] sm:$0xff]
  %v1145 = vld [vmem:[#allocation2 + $0x90] sm:$0xff]
  %v1146 = vld [vmem:[#allocation2 + $0x98] sm:$0xff]
  %v1147 = vld [vmem:[#allocation2 + $0xa0] sm:$0xff]
  %v1148 = vsel %vm893, %v1142, %v1145
  %v1149 = vsel %vm894, %v1143, %v1146
  %v1150 = vsel %vm895, %v1144, %v1147
  %v1151 = vpack.c.bf16 %v1141, %v1141
  %1152 = vmatprep.subr.bf16.mxu0 %v986
  %1153 = vmatpush1.bf16.msra.mxu0 %v985
  %1154 = vmatprep.subr.bf16.mxu0 %v989
  %1155 = vmatpush1.bf16.msra.mxu0 %v988
  %1156 = vmatprep.subr.bf16.mxu0 %v992
  %1157 = vmatpush1.bf16.msra.mxu0 %v991
  %1158 = vmatprep.subr.bf16.mxu0 %v995
  %1159 = vmatpush1.bf16.msra.mxu0 %v994
  %1160 = vmatprep.subr.bf16.mxu0 %v998
  %1161 = vmatpush1.bf16.msra.mxu0 %v997
  %1162 = vmatprep.subr.bf16.mxu0 %v1001
  %1163 = vmatpush1.bf16.msra.mxu0 %v1000
  %1164 = vmatprep.subr.bf16.mxu0 %v1004
  %1165 = vmatpush1.bf16.msra.mxu0 %v1003
  %1166 = vmatprep.subr.bf16.mxu0 %v1007
  %1167 = vmatpush1.bf16.msra.mxu0 %v1006
  %1168 = vmatprep.subr.bf16.mxu0 0
  %1169 = vmatpush1.bf16.msra.mxu0 0
  %1170 = vmatprep.subr.bf16.mxu0 0
  %1171 = vmatpush1.bf16.msra.mxu0 0
  %1172 = vmatprep.subr.bf16.mxu0 0
  %1173 = vmatpush1.bf16.msra.mxu0 0
  %1174 = vmatprep.subr.bf16.mxu0 0
  %1175 = vmatpush1.bf16.msra.mxu0 0
  %1176 = vmatprep.subr.bf16.mxu0 0
  %1177 = vmatpush1.bf16.msra.mxu0 0
  %1178 = vmatprep.subr.bf16.mxu0 0
  %1179 = vmatpush1.bf16.msra.mxu0 0
  %1180 = vmatprep.subr.bf16.mxu0 0
  %1181 = vmatpush1.bf16.msra.mxu0 0
  %1182 = vmatprep.subr.bf16.mxu0 0
  %1183 = vmatpush1.bf16.msra.mxu0 0
  %1184 = vmatprep.mubr.bf16.mxu0 0
  %1185 = vmatmul.mubr.bf16.gmra.mrb[0].mxu0 %v1151
  %v1186 = vpop.f32.mrb[0].mxu0
  %v1187 = vadd.f32 0.0, %v1186
  %v1188 = vpop.f32.mrb[0].mxu0
  %v1189 = vadd.f32 0.0, %v1188
  %v1190 = vpop.f32.mrb[0].mxu0
  %v1191 = vpop.f32.mrb[0].mxu0
  %1192 = vdwg.mxu0
  %1193 = vmatprep.subr.bf16.mxu0 0
  %1194 = vmatpush1.bf16.msra.mxu0 %v987
  %1195 = vmatprep.subr.bf16.mxu0 0
  %1196 = vmatpush1.bf16.msra.mxu0 %v990
  %1197 = vmatprep.subr.bf16.mxu0 0
  %1198 = vmatpush1.bf16.msra.mxu0 %v993
  %1199 = vmatprep.subr.bf16.mxu0 0
  %1200 = vmatpush1.bf16.msra.mxu0 %v996
  %1201 = vmatprep.subr.bf16.mxu0 0
  %1202 = vmatpush1.bf16.msra.mxu0 %v999
  %1203 = vmatprep.subr.bf16.mxu0 0
  %1204 = vmatpush1.bf16.msra.mxu0 %v1002
  %1205 = vmatprep.subr.bf16.mxu0 0
  %1206 = vmatpush1.bf16.msra.mxu0 %v1005
  %1207 = vmatprep.subr.bf16.mxu0 0
  %1208 = vmatpush1.bf16.msra.mxu0 %v1008
  %1209 = vmatprep.subr.bf16.mxu0 0
  %1210 = vmatpush1.bf16.msra.mxu0 0
  %1211 = vmatprep.subr.bf16.mxu0 0
  %1212 = vmatpush1.bf16.msra.mxu0 0
  %1213 = vmatprep.subr.bf16.mxu0 0
  %1214 = vmatpush1.bf16.msra.mxu0 0
  %1215 = vmatprep.subr.bf16.mxu0 0
  %1216 = vmatpush1.bf16.msra.mxu0 0
  %1217 = vmatprep.subr.bf16.mxu0 0
  %1218 = vmatpush1.bf16.msra.mxu0 0
  %1219 = vmatprep.subr.bf16.mxu0 0
  %1220 = vmatpush1.bf16.msra.mxu0 0
  %1221 = vmatprep.subr.bf16.mxu0 0
  %1222 = vmatpush1.bf16.msra.mxu0 0
  %1223 = vmatprep.subr.bf16.mxu0 0
  %1224 = vmatpush1.bf16.msra.mxu0 0
  %1225 = vmatprep.mubr.bf16.mxu0 0
  %1226 = vmatmul.mubr.bf16.gmra.mrb[0].mxu0 %v1151
  %v1227 = vpop.f32.mrb[0].mxu0
  %v1228 = vadd.f32 0.0, %v1227
  %v1229 = vpop.f32.mrb[0].mxu0
  %v1230 = vpop.f32.mrb[0].mxu0
  %v1231 = vpop.f32.mrb[0].mxu0
  %1232 = vdwg.mxu0
  %v1233 = vadd.f32 %v1148, %v1187
  %v1234 = vxor.u32 %v1233, 2147483648
  %v1235 = vmul.f32 %v1234, 1.442695
  %v1236 = vpow.pop %v1235
  %v1237 = vadd.f32 %v1236, 1.0
  %v1238 = vrcp.pop %v1237
  %v1239 = vmul.f32 1.0, %v1238
  %v1240 = vadd.f32 %v1149, %v1189
  %v1241 = vxor.u32 %v1240, 2147483648
  %v1242 = vmul.f32 %v1241, 1.442695
  %v1243 = vpow.pop %v1242
  %v1244 = vadd.f32 %v1243, 1.0
  %v1245 = vrcp.pop %v1244
  %v1246 = vmul.f32 1.0, %v1245
  %v1247 = vadd.f32 %v1228, %v1132
  %v1248 = vmul.f32 %v1239, %v1247
  %v1249 = vadd.f32 %v1150, %v1248
  %v1250 = vtanh.pop %v1249
  %v1251 = vsub.f32 1.0, %v1246
  %v1252 = vmul.f32 %v1251, %v1250
  %v1253 = vmul.f32 %v1246, %v1141
  %v1254 = vadd.f32 %v1252, %v1253
  %v1255 = vld [vmem:[#allocation2 + $0x30] sm:$0xff]
  %v1256 = vld [vmem:[#allocation2 + $0x38] sm:$0xff]
  %v1257 = vld [vmem:[#allocation2 + $0x40] sm:$0xff]
  %v1258 = vld [vmem:[#allocation2 + $0x78] sm:$0xff]
  %v1259 = vld [vmem:[#allocation2 + $0x80] sm:$0xff]
  %v1260 = vld [vmem:[#allocation2 + $0x88] sm:$0xff]
  %v1261 = vsel %vm893, %v1255, %v1258
  %v1262 = vsel %vm894, %v1256, %v1259
  %v1263 = vsel %vm895, %v1257, %v1260
  %v1264 = vpack.c.bf16 %v1254, %v1254
  %1265 = vmatprep.subr.bf16.mxu0 %v986
  %1266 = vmatpush1.bf16.msra.mxu0 %v985
  %1267 = vmatprep.subr.bf16.mxu0 %v989
  %1268 = vmatpush1.bf16.msra.mxu0 %v988
  %1269 = vmatprep.subr.bf16.mxu0 %v992
  %1270 = vmatpush1.bf16.msra.mxu0 %v991
  %1271 = vmatprep.subr.bf16.mxu0 %v995
  %1272 = vmatpush1.bf16.msra.mxu0 %v994
  %1273 = vmatprep.subr.bf16.mxu0 %v998
  %1274 = vmatpush1.bf16.msra.mxu0 %v997
  %1275 = vmatprep.subr.bf16.mxu0 %v1001
  %1276 = vmatpush1.bf16.msra.mxu0 %v1000
  %1277 = vmatprep.subr.bf16.mxu0 %v1004
  %1278 = vmatpush1.bf16.msra.mxu0 %v1003
  %1279 = vmatprep.subr.bf16.mxu0 %v1007
  %1280 = vmatpush1.bf16.msra.mxu0 %v1006
  %1281 = vmatprep.subr.bf16.mxu0 0
  %1282 = vmatpush1.bf16.msra.mxu0 0
  %1283 = vmatprep.subr.bf16.mxu0 0
  %1284 = vmatpush1.bf16.msra.mxu0 0
  %1285 = vmatprep.subr.bf16.mxu0 0
  %1286 = vmatpush1.bf16.msra.mxu0 0
  %1287 = vmatprep.subr.bf16.mxu0 0
  %1288 = vmatpush1.bf16.msra.mxu0 0
  %1289 = vmatprep.subr.bf16.mxu0 0
  %1290 = vmatpush1.bf16.msra.mxu0 0
  %1291 = vmatprep.subr.bf16.mxu0 0
  %1292 = vmatpush1.bf16.msra.mxu0 0
  %1293 = vmatprep.subr.bf16.mxu0 0
  %1294 = vmatpush1.bf16.msra.mxu0 0
  %1295 = vmatprep.subr.bf16.mxu0 0
  %1296 = vmatpush1.bf16.msra.mxu0 0
  %1297 = vmatprep.mubr.bf16.mxu0 0
  %1298 = vmatmul.mubr.bf16.gmra.mrb[0].mxu0 %v1264
  %v1299 = vpop.f32.mrb[0].mxu0
  %v1300 = vadd.f32 0.0, %v1299
  %v1301 = vpop.f32.mrb[0].mxu0
  %v1302 = vadd.f32 0.0, %v1301
  %v1303 = vpop.f32.mrb[0].mxu0
  %v1304 = vpop.f32.mrb[0].mxu0
  %1305 = vdwg.mxu0
  %1306 = vmatprep.subr.bf16.mxu0 0
  %1307 = vmatpush1.bf16.msra.mxu0 %v987
  %1308 = vmatprep.subr.bf16.mxu0 0
  %1309 = vmatpush1.bf16.msra.mxu0 %v990
  %1310 = vmatprep.subr.bf16.mxu0 0
  %1311 = vmatpush1.bf16.msra.mxu0 %v993
  %1312 = vmatprep.subr.bf16.mxu0 0
  %1313 = vmatpush1.bf16.msra.mxu0 %v996
  %1314 = vmatprep.subr.bf16.mxu0 0
  %1315 = vmatpush1.bf16.msra.mxu0 %v999
  %1316 = vmatprep.subr.bf16.mxu0 0
  %1317 = vmatpush1.bf16.msra.mxu0 %v1002
  %1318 = vmatprep.subr.bf16.mxu0 0
  %1319 = vmatpush1.bf16.msra.mxu0 %v1005
  %1320 = vmatprep.subr.bf16.mxu0 0
  %1321 = vmatpush1.bf16.msra.mxu0 %v1008
  %1322 = vmatprep.subr.bf16.mxu0 0
  %1323 = vmatpush1.bf16.msra.mxu0 0
  %1324 = vmatprep.subr.bf16.mxu0 0
  %1325 = vmatpush1.bf16.msra.mxu0 0
  %1326 = vmatprep.subr.bf16.mxu0 0
  %1327 = vmatpush1.bf16.msra.mxu0 0
  %1328 = vmatprep.subr.bf16.mxu0 0
  %1329 = vmatpush1.bf16.msra.mxu0 0
  %1330 = vmatprep.subr.bf16.mxu0 0
  %1331 = vmatpush1.bf16.msra.mxu0 0
  %1332 = vmatprep.subr.bf16.mxu0 0
  %1333 = vmatpush1.bf16.msra.mxu0 0
  %1334 = vmatprep.subr.bf16.mxu0 0
  %1335 = vmatpush1.bf16.msra.mxu0 0
  %1336 = vmatprep.subr.bf16.mxu0 0
  %1337 = vmatpush1.bf16.msra.mxu0 0
  %1338 = vmatprep.mubr.bf16.mxu0 0
  %1339 = vmatmul.mubr.bf16.gmra.mrb[0].mxu0 %v1264
  %v1340 = vpop.f32.mrb[0].mxu0
  %v1341 = vadd.f32 0.0, %v1340
  %v1342 = vpop.f32.mrb[0].mxu0
  %v1343 = vpop.f32.mrb[0].mxu0
  %v1344 = vpop.f32.mrb[0].mxu0
  %1345 = vdwg.mxu0
  %v1346 = vadd.f32 %v1261, %v1300
  %v1347 = vxor.u32 %v1346, 2147483648
  %v1348 = vmul.f32 %v1347, 1.442695
  %v1349 = vpow.pop %v1348
  %v1350 = vadd.f32 %v1349, 1.0
  %v1351 = vrcp.pop %v1350
  %v1352 = vmul.f32 1.0, %v1351
  %v1353 = vadd.f32 %v1262, %v1302
  %v1354 = vxor.u32 %v1353, 2147483648
  %v1355 = vmul.f32 %v1354, 1.442695
  %v1356 = vpow.pop %v1355
  %v1357 = vadd.f32 %v1356, 1.0
  %v1358 = vrcp.pop %v1357
  %v1359 = vmul.f32 1.0, %v1358
  %v1360 = vadd.f32 %v1341, %v1132
  %v1361 = vmul.f32 %v1352, %v1360
  %v1362 = vadd.f32 %v1263, %v1361
  %v1363 = vtanh.pop %v1362
  %v1364 = vsub.f32 1.0, %v1359
  %v1365 = vmul.f32 %v1364, %v1363
  %v1366 = vmul.f32 %v1359, %v1254
  %v1367 = vadd.f32 %v1365, %v1366
  %v1368 = vld [vmem:[#allocation2 + $0x48] sm:$0xff]
  %v1369 = vld [vmem:[#allocation2 + $0x50] sm:$0xff]
  %v1370 = vld [vmem:[#allocation2 + $0x58] sm:$0xff]
  %v1371 = vld [vmem:[#allocation2 + $0x60] sm:$0xff]
  %v1372 = vld [vmem:[#allocation2 + $0x68] sm:$0xff]
  %v1373 = vld [vmem:[#allocation2 + $0x70] sm:$0xff]
  %v1374 = vsel %vm893, %v1368, %v1371
  %v1375 = vsel %vm894, %v1369, %v1372
  %v1376 = vsel %vm895, %v1370, %v1373
  %v1377 = vpack.c.bf16 %v1367, %v1367
  %1378 = vmatprep.subr.bf16.mxu0 %v986
  %1379 = vmatpush1.bf16.msra.mxu0 %v985
  %1380 = vmatprep.subr.bf16.mxu0 %v989
  %1381 = vmatpush1.bf16.msra.mxu0 %v988
  %1382 = vmatprep.subr.bf16.mxu0 %v992
  %1383 = vmatpush1.bf16.msra.mxu0 %v991
  %1384 = vmatprep.subr.bf16.mxu0 %v995
  %1385 = vmatpush1.bf16.msra.mxu0 %v994
  %1386 = vmatprep.subr.bf16.mxu0 %v998
  %1387 = vmatpush1.bf16.msra.mxu0 %v997
  %1388 = vmatprep.subr.bf16.mxu0 %v1001
  %1389 = vmatpush1.bf16.msra.mxu0 %v1000
  %1390 = vmatprep.subr.bf16.mxu0 %v1004
  %1391 = vmatpush1.bf16.msra.mxu0 %v1003
  %1392 = vmatprep.subr.bf16.mxu0 %v1007
  %1393 = vmatpush1.bf16.msra.mxu0 %v1006
  %1394 = vmatprep.subr.bf16.mxu0 0
  %1395 = vmatpush1.bf16.msra.mxu0 0
  %1396 = vmatprep.subr.bf16.mxu0 0
  %1397 = vmatpush1.bf16.msra.mxu0 0
  %1398 = vmatprep.subr.bf16.mxu0 0
  %1399 = vmatpush1.bf16.msra.mxu0 0
  %1400 = vmatprep.subr.bf16.mxu0 0
  %1401 = vmatpush1.bf16.msra.mxu0 0
  %1402 = vmatprep.subr.bf16.mxu0 0
  %1403 = vmatpush1.bf16.msra.mxu0 0
  %1404 = vmatprep.subr.bf16.mxu0 0
  %1405 = vmatpush1.bf16.msra.mxu0 0
  %1406 = vmatprep.subr.bf16.mxu0 0
  %1407 = vmatpush1.bf16.msra.mxu0 0
  %1408 = vmatprep.subr.bf16.mxu0 0
  %1409 = vmatpush1.bf16.msra.mxu0 0
  %1410 = vmatprep.mubr.bf16.mxu0 0
  %1411 = vmatmul.mubr.bf16.gmra.mrb[0].mxu0 %v1377
  %v1412 = vpop.f32.mrb[0].mxu0
  %v1413 = vadd.f32 0.0, %v1412
  %v1414 = vpop.f32.mrb[0].mxu0
  %v1415 = vadd.f32 0.0, %v1414
  %v1416 = vpop.f32.mrb[0].mxu0
  %v1417 = vpop.f32.mrb[0].mxu0
  %1418 = vdwg.mxu0
  %1419 = vmatprep.subr.bf16.mxu0 0
  %1420 = vmatpush1.bf16.msra.mxu0 %v987
  %1421 = vmatprep.subr.bf16.mxu0 0
  %1422 = vmatpush1.bf16.msra.mxu0 %v990
  %1423 = vmatprep.subr.bf16.mxu0 0
  %1424 = vmatpush1.bf16.msra.mxu0 %v993
  %1425 = vmatprep.subr.bf16.mxu0 0
  %1426 = vmatpush1.bf16.msra.mxu0 %v996
  %1427 = vmatprep.subr.bf16.mxu0 0
  %1428 = vmatpush1.bf16.msra.mxu0 %v999
  %1429 = vmatprep.subr.bf16.mxu0 0
  %1430 = vmatpush1.bf16.msra.mxu0 %v1002
  %1431 = vmatprep.subr.bf16.mxu0 0
  %1432 = vmatpush1.bf16.msra.mxu0 %v1005
  %1433 = vmatprep.subr.bf16.mxu0 0
  %1434 = vmatpush1.bf16.msra.mxu0 %v1008
  %1435 = vmatprep.subr.bf16.mxu0 0
  %1436 = vmatpush1.bf16.msra.mxu0 0
  %1437 = vmatprep.subr.bf16.mxu0 0
  %1438 = vmatpush1.bf16.msra.mxu0 0
  %1439 = vmatprep.subr.bf16.mxu0 0
  %1440 = vmatpush1.bf16.msra.mxu0 0
  %1441 = vmatprep.subr.bf16.mxu0 0
  %1442 = vmatpush1.bf16.msra.mxu0 0
  %1443 = vmatprep.subr.bf16.mxu0 0
  %1444 = vmatpush1.bf16.msra.mxu0 0
  %1445 = vmatprep.subr.bf16.mxu0 0
  %1446 = vmatpush1.bf16.msra.mxu0 0
  %1447 = vmatprep.subr.bf16.mxu0 0
  %1448 = vmatpush1.bf16.msra.mxu0 0
  %1449 = vmatprep.subr.bf16.mxu0 0
  %1450 = vmatpush1.bf16.msra.mxu0 0
  %1451 = vmatprep.mubr.bf16.mxu0 0
  %1452 = vmatmul.mubr.bf16.gmra.mrb[0].mxu0 %v1377
  %v1453 = vpop.f32.mrb[0].mxu0
  %v1454 = vadd.f32 0.0, %v1453
  %v1455 = vpop.f32.mrb[0].mxu0
  %v1456 = vpop.f32.mrb[0].mxu0
  %v1457 = vpop.f32.mrb[0].mxu0
  %1458 = vdwg.mxu0
  %v1459 = vadd.f32 %v1374, %v1413
  %v1460 = vxor.u32 %v1459, 2147483648
  %v1461 = vmul.f32 %v1460, 1.442695
  %v1462 = vpow.pop %v1461
  %v1463 = vadd.f32 %v1462, 1.0
  %v1464 = vrcp.pop %v1463
  %v1465 = vmul.f32 1.0, %v1464
  %v1466 = vadd.f32 %v1375, %v1415
  %v1467 = vxor.u32 %v1466, 2147483648
  %v1468 = vmul.f32 %v1467, 1.442695
  %v1469 = vpow.pop %v1468
  %v1470 = vadd.f32 %v1469, 1.0
  %v1471 = vrcp.pop %v1470
  %v1472 = vmul.f32 1.0, %v1471
  %v1473 = vadd.f32 %v1454, %v1132
  %v1474 = vmul.f32 %v1465, %v1473
  %v1475 = vadd.f32 %v1376, %v1474
  %v1476 = vtanh.pop %v1475
  %v1477 = vsub.f32 1.0, %v1472
  %v1478 = vmul.f32 %v1477, %v1476
  %v1479 = vmul.f32 %v1472, %v1367
  %v1480 = vadd.f32 %v1478, %v1479
  %v1481 = vsel %vm893, %v1371, %v1368
  %v1482 = vsel %vm894, %v1372, %v1369
  %v1483 = vsel %vm895, %v1373, %v1370
  %v1484 = vpack.c.bf16 %v1480, %v1480
  %1485 = vmatprep.subr.bf16.mxu0 %v986
  %1486 = vmatpush1.bf16.msra.mxu0 %v985
  %1487 = vmatprep.subr.bf16.mxu0 %v989
  %1488 = vmatpush1.bf16.msra.mxu0 %v988
  %1489 = vmatprep.subr.bf16.mxu0 %v992
  %1490 = vmatpush1.bf16.msra.mxu0 %v991
  %1491 = vmatprep.subr.bf16.mxu0 %v995
  %1492 = vmatpush1.bf16.msra.mxu0 %v994
  %1493 = vmatprep.subr.bf16.mxu0 %v998
  %1494 = vmatpush1.bf16.msra.mxu0 %v997
  %1495 = vmatprep.subr.bf16.mxu0 %v1001
  %1496 = vmatpush1.bf16.msra.mxu0 %v1000
  %1497 = vmatprep.subr.bf16.mxu0 %v1004
  %1498 = vmatpush1.bf16.msra.mxu0 %v1003
  %1499 = vmatprep.subr.bf16.mxu0 %v1007
  %1500 = vmatpush1.bf16.msra.mxu0 %v1006
  %1501 = vmatprep.subr.bf16.mxu0 0
  %1502 = vmatpush1.bf16.msra.mxu0 0
  %1503 = vmatprep.subr.bf16.mxu0 0
  %1504 = vmatpush1.bf16.msra.mxu0 0
  %1505 = vmatprep.subr.bf16.mxu0 0
  %1506 = vmatpush1.bf16.msra.mxu0 0
  %1507 = vmatprep.subr.bf16.mxu0 0
  %1508 = vmatpush1.bf16.msra.mxu0 0
  %1509 = vmatprep.subr.bf16.mxu0 0
  %1510 = vmatpush1.bf16.msra.mxu0 0
  %1511 = vmatprep.subr.bf16.mxu0 0
  %1512 = vmatpush1.bf16.msra.mxu0 0
  %1513 = vmatprep.subr.bf16.mxu0 0
  %1514 = vmatpush1.bf16.msra.mxu0 0
  %1515 = vmatprep.subr.bf16.mxu0 0
  %1516 = vmatpush1.bf16.msra.mxu0 0
  %1517 = vmatprep.mubr.bf16.mxu0 0
  %1518 = vmatmul.mubr.bf16.gmra.mrb[0].mxu0 %v1484
  %v1519 = vpop.f32.mrb[0].mxu0
  %v1520 = vadd.f32 0.0, %v1519
  %v1521 = vpop.f32.mrb[0].mxu0
  %v1522 = vadd.f32 0.0, %v1521
  %v1523 = vpop.f32.mrb[0].mxu0
  %v1524 = vpop.f32.mrb[0].mxu0
  %1525 = vdwg.mxu0
  %1526 = vmatprep.subr.bf16.mxu0 0
  %1527 = vmatpush1.bf16.msra.mxu0 %v987
  %1528 = vmatprep.subr.bf16.mxu0 0
  %1529 = vmatpush1.bf16.msra.mxu0 %v990
  %1530 = vmatprep.subr.bf16.mxu0 0
  %1531 = vmatpush1.bf16.msra.mxu0 %v993
  %1532 = vmatprep.subr.bf16.mxu0 0
  %1533 = vmatpush1.bf16.msra.mxu0 %v996
  %1534 = vmatprep.subr.bf16.mxu0 0
  %1535 = vmatpush1.bf16.msra.mxu0 %v999
  %1536 = vmatprep.subr.bf16.mxu0 0
  %1537 = vmatpush1.bf16.msra.mxu0 %v1002
  %1538 = vmatprep.subr.bf16.mxu0 0
  %1539 = vmatpush1.bf16.msra.mxu0 %v1005
  %1540 = vmatprep.subr.bf16.mxu0 0
  %1541 = vmatpush1.bf16.msra.mxu0 %v1008
  %1542 = vmatprep.subr.bf16.mxu0 0
  %1543 = vmatpush1.bf16.msra.mxu0 0
  %1544 = vmatprep.subr.bf16.mxu0 0
  %1545 = vmatpush1.bf16.msra.mxu0 0
  %1546 = vmatprep.subr.bf16.mxu0 0
  %1547 = vmatpush1.bf16.msra.mxu0 0
  %1548 = vmatprep.subr.bf16.mxu0 0
  %1549 = vmatpush1.bf16.msra.mxu0 0
  %1550 = vmatprep.subr.bf16.mxu0 0
  %1551 = vmatpush1.bf16.msra.mxu0 0
  %1552 = vmatprep.subr.bf16.mxu0 0
  %1553 = vmatpush1.bf16.msra.mxu0 0
  %1554 = vmatprep.subr.bf16.mxu0 0
  %1555 = vmatpush1.bf16.msra.mxu0 0
  %1556 = vmatprep.subr.bf16.mxu0 0
  %1557 = vmatpush1.bf16.msra.mxu0 0
  %1558 = vmatprep.mubr.bf16.mxu0 0
  %1559 = vmatmul.mubr.bf16.gmra.mrb[0].mxu0 %v1484
  %v1560 = vpop.f32.mrb[0].mxu0
  %v1561 = vadd.f32 0.0, %v1560
  %v1562 = vpop.f32.mrb[0].mxu0
  %v1563 = vpop.f32.mrb[0].mxu0
  %v1564 = vpop.f32.mrb[0].mxu0
  %1565 = vdwg.mxu0
  %v1566 = vadd.f32 %v1481, %v1520
  %v1567 = vxor.u32 %v1566, 2147483648
  %v1568 = vmul.f32 %v1567, 1.442695
  %v1569 = vpow.pop %v1568
  %v1570 = vadd.f32 %v1569, 1.0
  %v1571 = vrcp.pop %v1570
  %v1572 = vmul.f32 1.0, %v1571
  %v1573 = vadd.f32 %v1482, %v1522
  %v1574 = vxor.u32 %v1573, 2147483648
  %v1575 = vmul.f32 %v1574, 1.442695
  %v1576 = vpow.pop %v1575
  %v1577 = vadd.f32 %v1576, 1.0
  %v1578 = vrcp.pop %v1577
  %v1579 = vmul.f32 1.0, %v1578
  %v1580 = vadd.f32 %v1561, %v1132
  %v1581 = vmul.f32 %v1572, %v1580
  %v1582 = vadd.f32 %v1483, %v1581
  %v1583 = vtanh.pop %v1582
  %v1584 = vsub.f32 1.0, %v1579
  %v1585 = vmul.f32 %v1584, %v1583
  %v1586 = vmul.f32 %v1579, %v1480
  %v1587 = vadd.f32 %v1585, %v1586
  %v1588 = vsel %vm893, %v1258, %v1255
  %v1589 = vsel %vm894, %v1259, %v1256
  %v1590 = vsel %vm895, %v1260, %v1257
  %v1591 = vpack.c.bf16 %v1587, %v1587
  %1592 = vmatprep.subr.bf16.mxu0 %v986
  %1593 = vmatpush1.bf16.msra.mxu0 %v985
  %1594 = vmatprep.subr.bf16.mxu0 %v989
  %1595 = vmatpush1.bf16.msra.mxu0 %v988
  %1596 = vmatprep.subr.bf16.mxu0 %v992
  %1597 = vmatpush1.bf16.msra.mxu0 %v991
  %1598 = vmatprep.subr.bf16.mxu0 %v995
  %1599 = vmatpush1.bf16.msra.mxu0 %v994
  %1600 = vmatprep.subr.bf16.mxu0 %v998
  %1601 = vmatpush1.bf16.msra.mxu0 %v997
  %1602 = vmatprep.subr.bf16.mxu0 %v1001
  %1603 = vmatpush1.bf16.msra.mxu0 %v1000
  %1604 = vmatprep.subr.bf16.mxu0 %v1004
  %1605 = vmatpush1.bf16.msra.mxu0 %v1003
  %1606 = vmatprep.subr.bf16.mxu0 %v1007
  %1607 = vmatpush1.bf16.msra.mxu0 %v1006
  %1608 = vmatprep.subr.bf16.mxu0 0
  %1609 = vmatpush1.bf16.msra.mxu0 0
  %1610 = vmatprep.subr.bf16.mxu0 0
  %1611 = vmatpush1.bf16.msra.mxu0 0
  %1612 = vmatprep.subr.bf16.mxu0 0
  %1613 = vmatpush1.bf16.msra.mxu0 0
  %1614 = vmatprep.subr.bf16.mxu0 0
  %1615 = vmatpush1.bf16.msra.mxu0 0
  %1616 = vmatprep.subr.bf16.mxu0 0
  %1617 = vmatpush1.bf16.msra.mxu0 0
  %1618 = vmatprep.subr.bf16.mxu0 0
  %1619 = vmatpush1.bf16.msra.mxu0 0
  %1620 = vmatprep.subr.bf16.mxu0 0
  %1621 = vmatpush1.bf16.msra.mxu0 0
  %1622 = vmatprep.subr.bf16.mxu0 0
  %1623 = vmatpush1.bf16.msra.mxu0 0
  %1624 = vmatprep.mubr.bf16.mxu0 0
  %1625 = vmatmul.mubr.bf16.gmra.mrb[0].mxu0 %v1591
  %v1626 = vpop.f32.mrb[0].mxu0
  %v1627 = vadd.f32 0.0, %v1626
  %v1628 = vpop.f32.mrb[0].mxu0
  %v1629 = vadd.f32 0.0, %v1628
  %v1630 = vpop.f32.mrb[0].mxu0
  %v1631 = vpop.f32.mrb[0].mxu0
  %1632 = vdwg.mxu0
  %1633 = vmatprep.subr.bf16.mxu0 0
  %1634 = vmatpush1.bf16.msra.mxu0 %v987
  %1635 = vmatprep.subr.bf16.mxu0 0
  %1636 = vmatpush1.bf16.msra.mxu0 %v990
  %1637 = vmatprep.subr.bf16.mxu0 0
  %1638 = vmatpush1.bf16.msra.mxu0 %v993
  %1639 = vmatprep.subr.bf16.mxu0 0
  %1640 = vmatpush1.bf16.msra.mxu0 %v996
  %1641 = vmatprep.subr.bf16.mxu0 0
  %1642 = vmatpush1.bf16.msra.mxu0 %v999
  %1643 = vmatprep.subr.bf16.mxu0 0
  %1644 = vmatpush1.bf16.msra.mxu0 %v1002
  %1645 = vmatprep.subr.bf16.mxu0 0
  %1646 = vmatpush1.bf16.msra.mxu0 %v1005
  %1647 = vmatprep.subr.bf16.mxu0 0
  %1648 = vmatpush1.bf16.msra.mxu0 %v1008
  %1649 = vmatprep.subr.bf16.mxu0 0
  %1650 = vmatpush1.bf16.msra.mxu0 0
  %1651 = vmatprep.subr.bf16.mxu0 0
  %1652 = vmatpush1.bf16.msra.mxu0 0
  %1653 = vmatprep.subr.bf16.mxu0 0
  %1654 = vmatpush1.bf16.msra.mxu0 0
  %1655 = vmatprep.subr.bf16.mxu0 0
  %1656 = vmatpush1.bf16.msra.mxu0 0
  %1657 = vmatprep.subr.bf16.mxu0 0
  %1658 = vmatpush1.bf16.msra.mxu0 0
  %1659 = vmatprep.subr.bf16.mxu0 0
  %1660 = vmatpush1.bf16.msra.mxu0 0
  %1661 = vmatprep.subr.bf16.mxu0 0
  %1662 = vmatpush1.bf16.msra.mxu0 0
  %1663 = vmatprep.subr.bf16.mxu0 0
  %1664 = vmatpush1.bf16.msra.mxu0 0
  %1665 = vmatprep.mubr.bf16.mxu0 0
  %1666 = vmatmul.mubr.bf16.gmra.mrb[0].mxu0 %v1591
  %v1667 = vpop.f32.mrb[0].mxu0
  %v1668 = vadd.f32 0.0, %v1667
  %v1669 = vpop.f32.mrb[0].mxu0
  %v1670 = vpop.f32.mrb[0].mxu0
  %v1671 = vpop.f32.mrb[0].mxu0
  %1672 = vdwg.mxu0
  %v1673 = vadd.f32 %v1588, %v1627
  %v1674 = vxor.u32 %v1673, 2147483648
  %v1675 = vmul.f32 %v1674, 1.442695
  %v1676 = vpow.pop %v1675
  %v1677 = vadd.f32 %v1676, 1.0
  %v1678 = vrcp.pop %v1677
  %v1679 = vmul.f32 1.0, %v1678
  %v1680 = vadd.f32 %v1589, %v1629
  %v1681 = vxor.u32 %v1680, 2147483648
  %v1682 = vmul.f32 %v1681, 1.442695
  %v1683 = vpow.pop %v1682
  %v1684 = vadd.f32 %v1683, 1.0
  %v1685 = vrcp.pop %v1684
  %v1686 = vmul.f32 1.0, %v1685
  %v1687 = vadd.f32 %v1668, %v1132
  %v1688 = vmul.f32 %v1679, %v1687
  %v1689 = vadd.f32 %v1590, %v1688
  %v1690 = vtanh.pop %v1689
  %v1691 = vsub.f32 1.0, %v1686
  %v1692 = vmul.f32 %v1691, %v1690
  %v1693 = vmul.f32 %v1686, %v1587
  %v1694 = vadd.f32 %v1692, %v1693
  %v1695 = vsel %vm893, %v1145, %v1142
  %v1696 = vsel %vm894, %v1146, %v1143
  %v1697 = vsel %vm895, %v1147, %v1144
  %v1698 = vpack.c.bf16 %v1694, %v1694
  %1699 = vmatprep.subr.bf16.mxu0 %v986
  %1700 = vmatpush1.bf16.msra.mxu0 %v985
  %1701 = vmatprep.subr.bf16.mxu0 %v989
  %1702 = vmatpush1.bf16.msra.mxu0 %v988
  %1703 = vmatprep.subr.bf16.mxu0 %v992
  %1704 = vmatpush1.bf16.msra.mxu0 %v991
  %1705 = vmatprep.subr.bf16.mxu0 %v995
  %1706 = vmatpush1.bf16.msra.mxu0 %v994
  %1707 = vmatprep.subr.bf16.mxu0 %v998
  %1708 = vmatpush1.bf16.msra.mxu0 %v997
  %1709 = vmatprep.subr.bf16.mxu0 %v1001
  %1710 = vmatpush1.bf16.msra.mxu0 %v1000
  %1711 = vmatprep.subr.bf16.mxu0 %v1004
  %1712 = vmatpush1.bf16.msra.mxu0 %v1003
  %1713 = vmatprep.subr.bf16.mxu0 %v1007
  %1714 = vmatpush1.bf16.msra.mxu0 %v1006
  %1715 = vmatprep.subr.bf16.mxu0 0
  %1716 = vmatpush1.bf16.msra.mxu0 0
  %1717 = vmatprep.subr.bf16.mxu0 0
  %1718 = vmatpush1.bf16.msra.mxu0 0
  %1719 = vmatprep.subr.bf16.mxu0 0
  %1720 = vmatpush1.bf16.msra.mxu0 0
  %1721 = vmatprep.subr.bf16.mxu0 0
  %1722 = vmatpush1.bf16.msra.mxu0 0
  %1723 = vmatprep.subr.bf16.mxu0 0
  %1724 = vmatpush1.bf16.msra.mxu0 0
  %1725 = vmatprep.subr.bf16.mxu0 0
  %1726 = vmatpush1.bf16.msra.mxu0 0
  %1727 = vmatprep.subr.bf16.mxu0 0
  %1728 = vmatpush1.bf16.msra.mxu0 0
  %1729 = vmatprep.subr.bf16.mxu0 0
  %1730 = vmatpush1.bf16.msra.mxu0 0
  %1731 = vmatprep.mubr.bf16.mxu0 0
  %1732 = vmatmul.mubr.bf16.gmra.mrb[0].mxu0 %v1698
  %v1733 = vpop.f32.mrb[0].mxu0
  %v1734 = vadd.f32 0.0, %v1733
  %v1735 = vpop.f32.mrb[0].mxu0
  %v1736 = vadd.f32 0.0, %v1735
  %v1737 = vpop.f32.mrb[0].mxu0
  %v1738 = vpop.f32.mrb[0].mxu0
  %1739 = vdwg.mxu0
  %1740 = vmatprep.subr.bf16.mxu0 0
  %1741 = vmatpush1.bf16.msra.mxu0 %v987
  %1742 = vmatprep.subr.bf16.mxu0 0
  %1743 = vmatpush1.bf16.msra.mxu0 %v990
  %1744 = vmatprep.subr.bf16.mxu0 0
  %1745 = vmatpush1.bf16.msra.mxu0 %v993
  %1746 = vmatprep.subr.bf16.mxu0 0
  %1747 = vmatpush1.bf16.msra.mxu0 %v996
  %1748 = vmatprep.subr.bf16.mxu0 0
  %1749 = vmatpush1.bf16.msra.mxu0 %v999
  %1750 = vmatprep.subr.bf16.mxu0 0
  %1751 = vmatpush1.bf16.msra.mxu0 %v1002
  %1752 = vmatprep.subr.bf16.mxu0 0
  %1753 = vmatpush1.bf16.msra.mxu0 %v1005
  %1754 = vmatprep.subr.bf16.mxu0 0
  %1755 = vmatpush1.bf16.msra.mxu0 %v1008
  %1756 = vmatprep.subr.bf16.mxu0 0
  %1757 = vmatpush1.bf16.msra.mxu0 0
  %1758 = vmatprep.subr.bf16.mxu0 0
  %1759 = vmatpush1.bf16.msra.mxu0 0
  %1760 = vmatprep.subr.bf16.mxu0 0
  %1761 = vmatpush1.bf16.msra.mxu0 0
  %1762 = vmatprep.subr.bf16.mxu0 0
  %1763 = vmatpush1.bf16.msra.mxu0 0
  %1764 = vmatprep.subr.bf16.mxu0 0
  %1765 = vmatpush1.bf16.msra.mxu0 0
  %1766 = vmatprep.subr.bf16.mxu0 0
  %1767 = vmatpush1.bf16.msra.mxu0 0
  %1768 = vmatprep.subr.bf16.mxu0 0
  %1769 = vmatpush1.bf16.msra.mxu0 0
  %1770 = vmatprep.subr.bf16.mxu0 0
  %1771 = vmatpush1.bf16.msra.mxu0 0
  %1772 = vmatprep.mubr.bf16.mxu0 0
  %1773 = vmatmul.mubr.bf16.gmra.mrb[0].mxu0 %v1698
  %v1774 = vpop.f32.mrb[0].mxu0
  %v1775 = vadd.f32 0.0, %v1774
  %v1776 = vpop.f32.mrb[0].mxu0
  %v1777 = vpop.f32.mrb[0].mxu0
  %v1778 = vpop.f32.mrb[0].mxu0
  %1779 = vdwg.mxu0
  %v1780 = vadd.f32 %v1695, %v1734
  %v1781 = vxor.u32 %v1780, 2147483648
  %v1782 = vmul.f32 %v1781, 1.442695
  %v1783 = vpow.pop %v1782
  %v1784 = vadd.f32 %v1783, 1.0
  %v1785 = vrcp.pop %v1784
  %v1786 = vmul.f32 1.0, %v1785
  %v1787 = vadd.f32 %v1696, %v1736
  %v1788 = vxor.u32 %v1787, 2147483648
  %v1789 = vmul.f32 %v1788, 1.442695
  %v1790 = vpow.pop %v1789
  %v1791 = vadd.f32 %v1790, 1.0
  %v1792 = vrcp.pop %v1791
  %v1793 = vmul.f32 1.0, %v1792
  %v1794 = vadd.f32 %v1775, %v1132
  %v1795 = vmul.f32 %v1786, %v1794
  %v1796 = vadd.f32 %v1697, %v1795
  %v1797 = vtanh.pop %v1796
  %v1798 = vsub.f32 1.0, %v1793
  %v1799 = vmul.f32 %v1798, %v1797
  %v1800 = vmul.f32 %v1793, %v1694
  %v1801 = vadd.f32 %v1799, %v1800
  %v1802 = vsel %vm893, %v899, %v896
  %v1803 = vsel %vm894, %v900, %v897
  %v1804 = vsel %vm895, %v901, %v898
  %v1805 = vpack.c.bf16 %v1801, %v1801
  %1806 = vmatprep.subr.bf16.mxu0 %v986
  %1807 = vmatpush1.bf16.msra.mxu0 %v985
  %1808 = vmatprep.subr.bf16.mxu0 %v989
  %1809 = vmatpush1.bf16.msra.mxu0 %v988
  %1810 = vmatprep.subr.bf16.mxu0 %v992
  %1811 = vmatpush1.bf16.msra.mxu0 %v991
  %1812 = vmatprep.subr.bf16.mxu0 %v995
  %1813 = vmatpush1.bf16.msra.mxu0 %v994
  %1814 = vmatprep.subr.bf16.mxu0 %v998
  %1815 = vmatpush1.bf16.msra.mxu0 %v997
  %1816 = vmatprep.subr.bf16.mxu0 %v1001
  %1817 = vmatpush1.bf16.msra.mxu0 %v1000
  %1818 = vmatprep.subr.bf16.mxu0 %v1004
  %1819 = vmatpush1.bf16.msra.mxu0 %v1003
  %1820 = vmatprep.subr.bf16.mxu0 %v1007
  %1821 = vmatpush1.bf16.msra.mxu0 %v1006
  %1822 = vmatprep.subr.bf16.mxu0 0
  %1823 = vmatpush1.bf16.msra.mxu0 0
  %1824 = vmatprep.subr.bf16.mxu0 0
  %1825 = vmatpush1.bf16.msra.mxu0 0
  %1826 = vmatprep.subr.bf16.mxu0 0
  %1827 = vmatpush1.bf16.msra.mxu0 0
  %1828 = vmatprep.subr.bf16.mxu0 0
  %1829 = vmatpush1.bf16.msra.mxu0 0
  %1830 = vmatprep.subr.bf16.mxu0 0
  %1831 = vmatpush1.bf16.msra.mxu0 0
  %1832 = vmatprep.subr.bf16.mxu0 0
  %1833 = vmatpush1.bf16.msra.mxu0 0
  %1834 = vmatprep.subr.bf16.mxu0 0
  %1835 = vmatpush1.bf16.msra.mxu0 0
  %1836 = vmatprep.subr.bf16.mxu0 0
  %1837 = vmatpush1.bf16.msra.mxu0 0
  %1838 = vmatprep.mubr.bf16.mxu0 0
  %1839 = vmatmul.mubr.bf16.gmra.mrb[0].mxu0 %v1805
  %v1840 = vpop.f32.mrb[0].mxu0
  %v1841 = vadd.f32 0.0, %v1840
  %v1842 = vpop.f32.mrb[0].mxu0
  %v1843 = vadd.f32 0.0, %v1842
  %v1844 = vpop.f32.mrb[0].mxu0
  %v1845 = vpop.f32.mrb[0].mxu0
  %1846 = vdwg.mxu0
  %1847 = vmatprep.subr.bf16.mxu0 0
  %1848 = vmatpush1.bf16.msra.mxu0 %v987
  %1849 = vmatprep.subr.bf16.mxu0 0
  %1850 = vmatpush1.bf16.msra.mxu0 %v990
  %1851 = vmatprep.subr.bf16.mxu0 0
  %1852 = vmatpush1.bf16.msra.mxu0 %v993
  %1853 = vmatprep.subr.bf16.mxu0 0
  %1854 = vmatpush1.bf16.msra.mxu0 %v996
  %1855 = vmatprep.subr.bf16.mxu0 0
  %1856 = vmatpush1.bf16.msra.mxu0 %v999
  %1857 = vmatprep.subr.bf16.mxu0 0
  %1858 = vmatpush1.bf16.msra.mxu0 %v1002
  %1859 = vmatprep.subr.bf16.mxu0 0
  %1860 = vmatpush1.bf16.msra.mxu0 %v1005
  %1861 = vmatprep.subr.bf16.mxu0 0
  %1862 = vmatpush1.bf16.msra.mxu0 %v1008
  %1863 = vmatprep.subr.bf16.mxu0 0
  %1864 = vmatpush1.bf16.msra.mxu0 0
  %1865 = vmatprep.subr.bf16.mxu0 0
  %1866 = vmatpush1.bf16.msra.mxu0 0
  %1867 = vmatprep.subr.bf16.mxu0 0
  %1868 = vmatpush1.bf16.msra.mxu0 0
  %1869 = vmatprep.subr.bf16.mxu0 0
  %1870 = vmatpush1.bf16.msra.mxu0 0
  %1871 = vmatprep.subr.bf16.mxu0 0
  %1872 = vmatpush1.bf16.msra.mxu0 0
  %1873 = vmatprep.subr.bf16.mxu0 0
  %1874 = vmatpush1.bf16.msra.mxu0 0
  %1875 = vmatprep.subr.bf16.mxu0 0
  %1876 = vmatpush1.bf16.msra.mxu0 0
  %1877 = vmatprep.subr.bf16.mxu0 0
  %1878 = vmatpush1.bf16.msra.mxu0 0
  %1879 = vmatprep.mubr.bf16.mxu0 0
  %1880 = vmatmul.mubr.bf16.gmra.mrb[0].mxu0 %v1805
  %v1881 = vpop.f32.mrb[0].mxu0
  %v1882 = vadd.f32 0.0, %v1881
  %v1883 = vpop.f32.mrb[0].mxu0
  %v1884 = vpop.f32.mrb[0].mxu0
  %v1885 = vpop.f32.mrb[0].mxu0
  %1886 = vdwg.mxu0
  %v1887 = vadd.f32 %v1802, %v1841
  %v1888 = vxor.u32 %v1887, 2147483648
  %v1889 = vmul.f32 %v1888, 1.442695
  %v1890 = vpow.pop %v1889
  %v1891 = vadd.f32 %v1890, 1.0
  %v1892 = vrcp.pop %v1891
  %v1893 = vmul.f32 1.0, %v1892
  %v1894 = vadd.f32 %v1803, %v1843
  %v1895 = vxor.u32 %v1894, 2147483648
  %v1896 = vmul.f32 %v1895, 1.442695
  %v1897 = vpow.pop %v1896
  %v1898 = vadd.f32 %v1897, 1.0
  %v1899 = vrcp.pop %v1898
  %v1900 = vmul.f32 1.0, %v1899
  %v1901 = vadd.f32 %v1882, %v1132
  %v1902 = vmul.f32 %v1893, %v1901
  %v1903 = vadd.f32 %v1804, %v1902
  %v1904 = vtanh.pop %v1903
  %v1905 = vsub.f32 1.0, %v1900
  %v1906 = vmul.f32 %v1905, %v1904
  %v1907 = vmul.f32 %v1900, %v1801
  %v1908 = vadd.f32 %v1906, %v1907
  %v1909 = vpack.c.bf16 %v1908, %v1908
  %v1910 = vld [vmem:[%s5] sm:$0xf]
  %v1911 = vld [vmem:[%s5 + $0x4] sm:$0xf]
  %v1912 = vld [vmem:[%s5 + $0x8] sm:$0xf]
  %v1913 = vld [vmem:[%s5 + $0xc] sm:$0xf]
  %v1914 = vld [vmem:[%s5 + $0x10] sm:$0xf]
  %v1915 = vld [vmem:[%s5 + $0x14] sm:$0xf]
  %v1916 = vld [vmem:[%s5 + $0x18] sm:$0xf]
  %v1917 = vld [vmem:[%s5 + $0x1c] sm:$0xf]
  %v1918 = vld [vmem:[%s5 + $0x20] sm:$0xf]
  %v1919 = vld [vmem:[%s5 + $0x24] sm:$0xf]
  %v1920 = vld [vmem:[%s5 + $0x28] sm:$0xf]
  %v1921 = vld [vmem:[%s5 + $0x2c] sm:$0xf]
  %v1922 = vld [vmem:[%s5 + $0x30] sm:$0xf]
  %v1923 = vld [vmem:[%s5 + $0x34] sm:$0xf]
  %v1924 = vld [vmem:[%s5 + $0x38] sm:$0xf]
  %v1925 = vld [vmem:[%s5 + $0x3c] sm:$0xf]
  %v1926 = vld [vmem:[%s6] sm:$0x1]
  %v1928 = vlaneseq
  %v1929 = vshrl.u32 %v1928, 7
  %v1930 = vsub.s32 0, %v1929
  %v1931 = vrot.slane %v1926, %v1930
  %v1949 = vunpack.c.l.b16 %v1910
  %v1950 = vunpack.c.l.b16 %v1911
  %v1951 = vunpack.c.l.b16 %v1912
  %v1952 = vunpack.c.l.b16 %v1913
  %v1953 = vunpack.c.l.b16 %v1914
  %v1954 = vunpack.c.l.b16 %v1915
  %v1955 = vunpack.c.l.b16 %v1916
  %v1956 = vunpack.c.l.b16 %v1917
  %v1957 = vunpack.c.l.b16 %v1918
  %v1958 = vunpack.c.l.b16 %v1919
  %v1959 = vunpack.c.l.b16 %v1920
  %v1960 = vunpack.c.l.b16 %v1921
  %v1961 = vunpack.c.l.b16 %v1922
  %v1962 = vunpack.c.l.b16 %v1923
  %v1963 = vunpack.c.l.b16 %v1924
  %v1964 = vunpack.c.l.b16 %v1925
  %v1965 = vpack.c.b16 %v1950, %v1949
  %v1966 = vpack.c.b16 %v1952, %v1951
  %v1967 = vpack.c.b16 %v1954, %v1953
  %v1968 = vpack.c.b16 %v1956, %v1955
  %v1969 = vpack.c.b16 %v1958, %v1957
  %v1970 = vpack.c.b16 %v1960, %v1959
  %v1971 = vpack.c.b16 %v1962, %v1961
  %v1972 = vpack.c.b16 %v1964, %v1963
  %1981 = vmatprep.subr.bf16.mxu0 0
  %1982 = vmatpush1.bf16.msra.mxu0 %v1965
  %1983 = vmatprep.subr.bf16.mxu0 0
  %1984 = vmatpush1.bf16.msra.mxu0 %v1966
  %1985 = vmatprep.subr.bf16.mxu0 0
  %1986 = vmatpush1.bf16.msra.mxu0 %v1967
  %1987 = vmatprep.subr.bf16.mxu0 0
  %1988 = vmatpush1.bf16.msra.mxu0 %v1968
  %1989 = vmatprep.subr.bf16.mxu0 0
  %1990 = vmatpush1.bf16.msra.mxu0 %v1969
  %1991 = vmatprep.subr.bf16.mxu0 0
  %1992 = vmatpush1.bf16.msra.mxu0 %v1970
  %1993 = vmatprep.subr.bf16.mxu0 0
  %1994 = vmatpush1.bf16.msra.mxu0 %v1971
  %1995 = vmatprep.subr.bf16.mxu0 0
  %1996 = vmatpush1.bf16.msra.mxu0 %v1972
  %1997 = vmatprep.subr.bf16.mxu0 0
  %1998 = vmatpush1.bf16.msra.mxu0 0
  %1999 = vmatprep.subr.bf16.mxu0 0
  %2000 = vmatpush1.bf16.msra.mxu0 0
  %2001 = vmatprep.subr.bf16.mxu0 0
  %2002 = vmatpush1.bf16.msra.mxu0 0
  %2003 = vmatprep.subr.bf16.mxu0 0
  %2004 = vmatpush1.bf16.msra.mxu0 0
  %2005 = vmatprep.subr.bf16.mxu0 0
  %2006 = vmatpush1.bf16.msra.mxu0 0
  %2007 = vmatprep.subr.bf16.mxu0 0
  %2008 = vmatpush1.bf16.msra.mxu0 0
  %2009 = vmatprep.subr.bf16.mxu0 0
  %2010 = vmatpush1.bf16.msra.mxu0 0
  %2011 = vmatprep.subr.bf16.mxu0 0
  %2012 = vmatpush1.bf16.msra.mxu0 0
  %2013 = vmatprep.mubr.bf16.mxu0 0
  %2014 = vmatmul.mubr.bf16.gmra.mrb[0].mxu0 %v1909
  %v2015 = vpop.f32.mrb[0].mxu0
  %v2016 = vadd.f32 %v1931, %v2015
  %v2017 = vpop.f32.mrb[0].mxu0
  %v2018 = vpop.f32.mrb[0].mxu0
  %v2019 = vpop.f32.mrb[0].mxu0
  %2020 = vdwg.mxu0
  %2021 = vst [vmem:[%s7] sm:$0xff] %v2016
  // Predicated region
  $region30: #{sentiment_classifier_gru_forward.1} parent=0 // pred_check
    _
  $region31: #{sentiment_classifier_gru_forward.1} parent=0 // pred_check_branch
    %2023 = sbr.rel (0) target = $region33
  $region32: #{sentiment_classifier_gru_forward.1} parent=0 // pred_region
    _
  $region33: #{sentiment_classifier_gru_forward.1} parent=0 // pred_fallthru
    _
  // Predicated region
  $region34: #{sentiment_classifier_gru_forward.1} parent=0 // pred_check
    _
  $region35: #{sentiment_classifier_gru_forward.1} parent=0 // pred_check_branch
    %2025 = sbr.rel (0) target = $region37
  $region36: #{sentiment_classifier_gru_forward.1} parent=0 // pred_region
    _
  $region37: #{sentiment_classifier_gru_forward.1} parent=0 // pred_fallthru
    _

</llo_original>
